<compile_context>
chip_gen: v6e
topology: v6e:2x2x1
jax: 0.10.0
libtpu: 0.0.40
codegen_flags: <defaults>
</compile_context>

<pallas_src>
import jax
import jax.numpy as jnp
from jax import lax
from jax.experimental import pallas as pl
from jax.experimental.pallas import tpu as pltpu

FEATURES = 32 * 8 * 8  # 2048

# Batch-tile size. 512 rows of f32 activations = 4 MiB per buffer; with
# double-buffered in+out (~16 MiB) plus resident bf16 weights this fits the
# 64 MiB physical VMEM on v7x and easily fits v5e/v6e (128 MiB).  On v5e/v6e
# a TM=1024 sweep (with vmem_limit ~80 MiB) is worth ~1% if desired.
DEFAULT_TM = 512

# Only split the batch across >= 2 tiles (for v7x's two TensorCores) when the
# batch is big enough that the split is worthwhile.
_MIN_SPLIT_ROWS = 256


def _round_up(x, m):
    return ((x + m - 1) // m) * m


def _ae_latent_kernel(x_ref, w1_ref, b1_ref, w2_ref, b2_ref, o_ref):
    # x_ref : (TM, 2048) f32       w1_ref: (2048, L)  bf16 (pre-transposed)
    # b1_ref: (1, L) f32           w2_ref: (L, 2048)  bf16 (pre-transposed)
    # b2_ref: (1, 2048) f32        o_ref : (TM, 2048) f32
    x = x_ref[...].astype(jnp.bfloat16)

    # h = x @ w1_t   (standard contraction: K on sublanes, N on lanes)
    h = jnp.dot(x, w1_ref[...], preferred_element_type=jnp.float32) + b1_ref[...]
    # y = h @ w2_t
    y = jnp.dot(h.astype(jnp.bfloat16), w2_ref[...],
                preferred_element_type=jnp.float32) + b2_ref[...]
    o_ref[...] = y.astype(o_ref.dtype)


def cinic10_ae_latent(x_nchw, w1_t, b1, w2_t, b2, *, tm=DEFAULT_TM):
    """Forward pass of Cinic10_AE_Latent.

    x_nchw: (B, 32, 8, 8) float32
    w1_t: (2048, latent)  -- Linear(2048 -> latent) weight, PRE-TRANSPOSED, bf16
    b1:   (latent,)
    w2_t: (latent, 2048)  -- Linear(latent -> 2048) weight, PRE-TRANSPOSED, bf16
    b2:   (2048,)

    Weights should be provided bf16 (cast once at parameter-prep time); f32
    weights are accepted but converted here, doubling weight HBM traffic.
    """
    B = x_nchw.shape[0]
    latent = w1_t.shape[1]
    assert w1_t.shape == (FEATURES, latent)
    assert w2_t.shape == (latent, FEATURES)

    x_flat = x_nchw.reshape(B, FEATURES)

    # Explicit weight-dtype contract: bf16 on the MXU.  (No-op if the caller
    # already did the one-time param-prep cast.)
    if w1_t.dtype != jnp.bfloat16:
        w1_t = w1_t.astype(jnp.bfloat16)
    if w2_t.dtype != jnp.bfloat16:
        w2_t = w2_t.astype(jnp.bfloat16)

    b1_2d = b1.reshape(1, latent).astype(jnp.float32)
    b2_2d = b2.reshape(1, FEATURES).astype(jnp.float32)

    # Batch-tile selection.
    tm = min(tm, B)
    if B >= _MIN_SPLIT_ROWS:
        # Guarantee >= 2 grid steps so dimension_semantics=("parallel",) can
        # shard the batch across both TensorCores on v7x.
        tm = min(tm, _round_up(pl.cdiv(B, 2), 8))
    grid = (pl.cdiv(B, tm),)

    w_bytes = (w1_t.size * w1_t.dtype.itemsize + w2_t.size * w2_t.dtype.itemsize)
    cost = pl.CostEstimate(
        flops=4 * B * FEATURES * latent,            # two matmuls
        transcendentals=0,
        bytes_accessed=w_bytes + 2 * B * FEATURES * 4 + (latent + FEATURES) * 4,
    )

    out_flat = pl.pallas_call(
        _ae_latent_kernel,
        out_shape=jax.ShapeDtypeStruct((B, FEATURES), x_flat.dtype),
        grid=grid,
        in_specs=[
            pl.BlockSpec((tm, FEATURES), lambda i: (i, 0)),        # x tile
            pl.BlockSpec((FEATURES, latent), lambda i: (0, 0)),    # w1_t resident
            pl.BlockSpec((1, latent), lambda i: (0, 0)),           # b1 resident
            pl.BlockSpec((latent, FEATURES), lambda i: (0, 0)),    # w2_t resident
            pl.BlockSpec((1, FEATURES), lambda i: (0, 0)),         # b2 resident
        ],
        out_specs=pl.BlockSpec((tm, FEATURES), lambda i: (i, 0)),
        compiler_params=pltpu.CompilerParams(
            dimension_semantics=("parallel",),
            vmem_limit_bytes=48 << 20,
        ),
        cost_estimate=cost,
    )(x_flat, w1_t, b1_2d, w2_t, b2_2d)

    return out_flat.reshape(B, 32, 8, 8)


def _init_linear(key, out_features, in_features):
    """Deterministic init matching PyTorch nn.Linear defaults (U(-k, k), k=1/sqrt(fan_in))."""
    k = 1.0 / jnp.sqrt(jnp.float32(in_features))
    kw, kb = jax.random.split(key)
    w = jax.random.uniform(kw, (out_features, in_features), jnp.float32, -k, k)
    b = jax.random.uniform(kb, (out_features,), jnp.float32, -k, k)
    return w, b


if __name__ == "__main__":
    latent_size = 128
    B = 2

    root = jax.random.PRNGKey(0)
    k_x, k_l1, k_l2 = jax.random.split(root, 3)

    x = jax.random.normal(k_x, (B, 32, 8, 8), jnp.float32)
    w1_f32, b1 = _init_linear(k_l1, latent_size, FEATURES)   # Linear(2048 -> latent)
    w2_f32, b2 = _init_linear(k_l2, FEATURES, latent_size)   # Linear(latent -> 2048)

    # Parameter prep (done ONCE, not per call): transpose to (in, out) layout
    # and cast MXU weights to bf16.
    w1_t = jnp.asarray(w1_f32.T, dtype=jnp.bfloat16)   # (2048, latent)
    w2_t = jnp.asarray(w2_f32.T, dtype=jnp.bfloat16)   # (latent, 2048)

    out = cinic10_ae_latent(x, w1_t, b1, w2_t, b2)
    out = jax.block_until_ready(out)
    assert out.shape == (B, 32, 8, 8)

    # Matched-precision reference (bf16 matmul inputs, f32 accumulate/bias).
    xf = x.reshape(B, FEATURES)
    h_ref = jnp.dot(xf.astype(jnp.bfloat16), w1_t,
                    preferred_element_type=jnp.float32) + b1
    y_ref = jnp.dot(h_ref.astype(jnp.bfloat16), w2_t,
                    preferred_element_type=jnp.float32) + b2
    ref = y_ref.reshape(B, 32, 8, 8)
    assert jnp.allclose(out, ref, atol=1e-2, rtol=1e-2)

    # Loose sanity check against the full-f32 PyTorch-equivalent math.
    ref_f32 = ((xf @ w1_f32.T + b1) @ w2_f32.T + b2).reshape(B, 32, 8, 8)
    assert jnp.allclose(out, ref_f32, atol=1e-1, rtol=1e-1)

    print("KERNEL_OK")
</pallas_src>

<mosaic_0001>
module attributes {stable_mosaic.version = 11 : i64} {
  func.func @_ae_latent_kernel(%arg0: i32, %arg1: memref<2x2048xf32, #tpu.memory_space<vmem>>, %arg2: memref<2048x128xbf16, #tpu.memory_space<vmem>>, %arg3: memref<1x128xf32, #tpu.memory_space<vmem>>, %arg4: memref<128x2048xbf16, #tpu.memory_space<vmem>>, %arg5: memref<1x2048xf32, #tpu.memory_space<vmem>>, %arg6: memref<2x2048xf32, #tpu.memory_space<vmem>>) attributes {dimension_semantics = [#tpu.dimension_semantics<parallel>], iteration_bounds = array<i64: 1>, scalar_prefetch = 0 : i64, scratch_operands = 0 : i64, tpu.core_type = #tpu.core_type<tc>, window_params = [{transform_indices = @transform_0, window_bounds = array<i64: 2, 2048>}, {pipeline_mode = #tpu.pipeline_mode<synchronous>, transform_indices = @transform_1, window_bounds = array<i64: 2048, 128>}, {pipeline_mode = #tpu.pipeline_mode<synchronous>, transform_indices = @transform_2, window_bounds = array<i64: 1, 128>}, {pipeline_mode = #tpu.pipeline_mode<synchronous>, transform_indices = @transform_3, window_bounds = array<i64: 128, 2048>}, {pipeline_mode = #tpu.pipeline_mode<synchronous>, transform_indices = @transform_4, window_bounds = array<i64: 1, 2048>}, {transform_indices = @transform_5, window_bounds = array<i64: 2, 2048>}]} {
    %c0 = arith.constant 0 : index
    %c0_0 = arith.constant 0 : index
    %0 = vector.load %arg1[%c0, %c0_0] : memref<2x2048xf32, #tpu.memory_space<vmem>>, vector<2x2048xf32>
    %1 = arith.truncf %0 : vector<2x2048xf32> to vector<2x2048xbf16>
    %c0_1 = arith.constant 0 : index
    %c0_2 = arith.constant 0 : index
    %2 = vector.load %arg2[%c0_1, %c0_2] : memref<2048x128xbf16, #tpu.memory_space<vmem>>, vector<2048x128xbf16>
    %cst = arith.constant dense<0.000000e+00> : vector<2x128xf32>
    %3 = tpu.matmul %1, %2, %cst {dimension_numbers = #tpu.dot_dimension_numbers<[1], [0], [0], [1], [0, 0, 1, 1], [], []>} : vector<2x2048xbf16>, vector<2048x128xbf16>, vector<2x128xf32> -> vector<2x128xf32>
    %c0_3 = arith.constant 0 : index
    %c0_4 = arith.constant 0 : index
    %4 = vector.load %arg3[%c0_3, %c0_4] : memref<1x128xf32, #tpu.memory_space<vmem>>, vector<1x128xf32>
    %5 = vector.broadcast %4 : vector<1x128xf32> to vector<2x128xf32>
    %6 = arith.addf %3, %5 : vector<2x128xf32>
    %7 = arith.truncf %6 : vector<2x128xf32> to vector<2x128xbf16>
    %c0_5 = arith.constant 0 : index
    %c0_6 = arith.constant 0 : index
    %8 = vector.load %arg4[%c0_5, %c0_6] : memref<128x2048xbf16, #tpu.memory_space<vmem>>, vector<128x2048xbf16>
    %cst_7 = arith.constant dense<0.000000e+00> : vector<2x2048xf32>
    %9 = tpu.matmul %7, %8, %cst_7 {dimension_numbers = #tpu.dot_dimension_numbers<[1], [0], [0], [1], [0, 0, 1, 1], [], []>} : vector<2x128xbf16>, vector<128x2048xbf16>, vector<2x2048xf32> -> vector<2x2048xf32>
    %c0_8 = arith.constant 0 : index
    %c0_9 = arith.constant 0 : index
    %10 = vector.load %arg5[%c0_8, %c0_9] : memref<1x2048xf32, #tpu.memory_space<vmem>>, vector<1x2048xf32>
    %11 = vector.broadcast %10 : vector<1x2048xf32> to vector<2x2048xf32>
    %12 = arith.addf %9, %11 : vector<2x2048xf32>
    %c0_10 = arith.constant 0 : index
    %c0_11 = arith.constant 0 : index
    %13 = vector.load %arg6[%c0_10, %c0_11] : memref<2x2048xf32, #tpu.memory_space<vmem>>, vector<2x2048xf32>
    tpu.vector_store %arg6[%c0_10, %c0_11], %12 {strides = array<i32>} : memref<2x2048xf32, #tpu.memory_space<vmem>>, vector<2x2048xf32>,
    return
  }
  func.func @transform_0(%arg0: i32) -> (i32, i32) {
    %c0_i32 = arith.constant 0 : i32
    %c0_i32_0 = arith.constant 0 : i32
    return %arg0, %c0_i32 : i32, i32
  }
  func.func @transform_1(%arg0: i32) -> (i32, i32) {
    %c0_i32 = arith.constant 0 : i32
    %c0_i32_0 = arith.constant 0 : i32
    %c0_i32_1 = arith.constant 0 : i32
    return %c0_i32, %c0_i32_0 : i32, i32
  }
  func.func @transform_2(%arg0: i32) -> (i32, i32) {
    %c0_i32 = arith.constant 0 : i32
    %c0_i32_0 = arith.constant 0 : i32
    %c0_i32_1 = arith.constant 0 : i32
    return %c0_i32, %c0_i32_0 : i32, i32
  }
  func.func @transform_3(%arg0: i32) -> (i32, i32) {
    %c0_i32 = arith.constant 0 : i32
    %c0_i32_0 = arith.constant 0 : i32
    %c0_i32_1 = arith.constant 0 : i32
    return %c0_i32, %c0_i32_0 : i32, i32
  }
  func.func @transform_4(%arg0: i32) -> (i32, i32) {
    %c0_i32 = arith.constant 0 : i32
    %c0_i32_0 = arith.constant 0 : i32
    %c0_i32_1 = arith.constant 0 : i32
    return %c0_i32, %c0_i32_0 : i32, i32
  }
  func.func @transform_5(%arg0: i32) -> (i32, i32) {
    %c0_i32 = arith.constant 0 : i32
    %c0_i32_0 = arith.constant 0 : i32
    return %arg0, %c0_i32 : i32, i32
  }
}

</mosaic_0001>

<llo_original>
// kernel: tpu_custom_call.1
$region0: #{tpu_custom_call.1}
  #allocation0 [shape = 'u32[]', space=smem, size = 0x4, offset = 0x4, fixed_abs, tag = 'smem constant byte address 0x4 - core index']
  #allocation1 [shape = 'u32[144,128]{1,0:T(1,128)}', space=vmem, size = 0x12000, scoped, tag = 'internal scratch']
  %s0 = inlined_call_operand.hbm [shape: f32[2,2048], index: 0, kind: input, shape index: {}]
  %s1 = inlined_call_operand.hbm [shape: bf16[2048,128], index: 1, kind: input, shape index: {}]
  %s2 = inlined_call_operand.vmem [shape: f32[1,128], index: 2, kind: input, shape index: {}]
  %s3 = inlined_call_operand.hbm [shape: bf16[128,2048], index: 3, kind: input, shape index: {}]
  %s4 = inlined_call_operand.hbm [shape: f32[1,2048], index: 4, kind: input, shape index: {}]
  %s5 = inlined_call_operand.hbm [shape: f32[2,2048], index: 5, kind: output, shape index: {}]
  %s6 = sld [smem:[#allocation0]]
  $region46: #{tpu_custom_call.1} parent=0
    _
  %s8 = ssub.s32 1, %s6
  %s9 = scalar_select 0, %s8, %s6
  $region1: #{tpu_custom_call.1} parent=0
    #allocation2 [shape = 'u8[16384]{0}', space=vmem, size = 0x4000, scoped, tag = 'input window, operand 0, single buffered']
    #allocation3 [shape = 's32[1]{0}', space=sflag, size = 0x4, scoped, tag = 'scoped memory for tpu_custom_call.1']
    #allocation4 [shape = 's32[1]{0}', space=sflag, size = 0x4, scoped, tag = 'scoped memory for tpu_custom_call.1']
    #allocation5 [shape = 'u8[524288]{0}', space=vmem, size = 0x80000, scoped, tag = 'input window, operand 1, single buffered']
    #allocation6 [shape = 's32[1]{0}', space=sflag, size = 0x4, scoped, tag = 'scoped memory for tpu_custom_call.1']
    #allocation7 [shape = 'u8[524288]{0}', space=vmem, size = 0x80000, scoped, tag = 'input window, operand 3, single buffered']
    #allocation8 [shape = 'u8[8192]{0}', space=vmem, size = 0x2000, scoped, tag = 'input window, operand 4, single buffered']
    #allocation9 [shape = 's32[1]{0}', space=sflag, size = 0x4, scoped, tag = 'scoped memory for tpu_custom_call.1']
    #allocation10 [shape = 'u8[16384]{0}', space=vmem, size = 0x4000, scoped, tag = 'output window, operand 0, single buffered']
    %10 = vsyncpa [#allocation3], 0
    %11 = vsyncpa [#allocation6], 0
    %12 = vsyncpa [#allocation9], 0
    %13 = vsyncpa [#allocation4], 0
    // Predicated region
    $region2: #{tpu_custom_call.1} parent=1 // pred_check
      _
    $region3: #{tpu_custom_call.1} parent=1 // pred_check_branch
      %15 = sbr.rel (0) target = $region5
    $region4: #{tpu_custom_call.1} parent=1 // pred_region
      %s17 = ssub.s32 512, 512
      %18 = vsyncadd [#allocation3], %s17
      %s20 = sshll.u32 [#allocation2], 4
      %s21 = int_to_ptr.vmem [resolvable:$true] %s20
      %23 = dma.hbm_to_vmem [thread:$0]  %s0, 512, %s21, [#allocation3]
    $region5: #{tpu_custom_call.1} parent=1 // pred_fallthru
      _
    // Predicated region
    $region6: #{tpu_custom_call.1} parent=1 // pred_check
      _
    $region7: #{tpu_custom_call.1} parent=1 // pred_check_branch
      %25 = sbr.rel (0) target = $region9
    $region8: #{tpu_custom_call.1} parent=1 // pred_region
      %s27 = ssub.s32 16384, 16384
      %28 = vsyncadd [#allocation6], %s27
      %s29 = sshll.u32 [#allocation5], 4
      %s30 = int_to_ptr.vmem [resolvable:$true] %s29
      %35 = dma.hbm_to_vmem [thread:$0]  %s1, 16384, %s30, [#allocation6], 64, 64, 4
    $region9: #{tpu_custom_call.1} parent=1 // pred_fallthru
      _
    // Predicated region
    $region10: #{tpu_custom_call.1} parent=1 // pred_check
      _
    $region11: #{tpu_custom_call.1} parent=1 // pred_check_branch
      %37 = sbr.rel (0) target = $region13
    $region12: #{tpu_custom_call.1} parent=1 // pred_region
      _
    $region13: #{tpu_custom_call.1} parent=1 // pred_fallthru
      _
    // Predicated region
    $region14: #{tpu_custom_call.1} parent=1 // pred_check
      _
    $region15: #{tpu_custom_call.1} parent=1 // pred_check_branch
      %39 = sbr.rel (0) target = $region17
    $region16: #{tpu_custom_call.1} parent=1 // pred_region
      %s41 = ssub.s32 16384, 16384
      %42 = vsyncadd [#allocation6], %s41
      %s43 = sshll.u32 [#allocation7], 4
      %s44 = int_to_ptr.vmem [resolvable:$true] %s43
      %49 = dma.hbm_to_vmem [thread:$0]  %s3, 16384, %s44, [#allocation6], 1024, 1024, 64
    $region17: #{tpu_custom_call.1} parent=1 // pred_fallthru
      _
    // Predicated region
    $region18: #{tpu_custom_call.1} parent=1 // pred_check
      _
    $region19: #{tpu_custom_call.1} parent=1 // pred_check_branch
      %51 = sbr.rel (0) target = $region21
    $region20: #{tpu_custom_call.1} parent=1 // pred_region
      %s53 = ssub.s32 256, 256
      %54 = vsyncadd [#allocation9], %s53
      %s56 = sshll.u32 [#allocation8], 4
      %s57 = int_to_ptr.vmem [resolvable:$true] %s56
      %59 = dma.hbm_to_vmem [thread:$0]  %s4, 256, %s57, [#allocation9]
    $region21: #{tpu_custom_call.1} parent=1 // pred_fallthru
      _
    // Predicated region
    $region22: #{tpu_custom_call.1} parent=1 // pred_check
      _
    $region23: #{tpu_custom_call.1} parent=1 // pred_check_branch
      %61 = sbr.rel (0) target = $region25
    $region24: #{tpu_custom_call.1} parent=1 // pred_region
      %62 = dma.done [#allocation3], 512
    $region25: #{tpu_custom_call.1} parent=1 // pred_fallthru
      _
    // Predicated region
    $region26: #{tpu_custom_call.1} parent=1 // pred_check
      _
    $region27: #{tpu_custom_call.1} parent=1 // pred_check_branch
      %64 = sbr.rel (0) target = $region29
    $region28: #{tpu_custom_call.1} parent=1 // pred_region
      %65 = dma.done [#allocation6], 16384
    $region29: #{tpu_custom_call.1} parent=1 // pred_fallthru
      _
    // Predicated region
    $region30: #{tpu_custom_call.1} parent=1 // pred_check
      _
    $region31: #{tpu_custom_call.1} parent=1 // pred_check_branch
      %67 = sbr.rel (0) target = $region33
    $region32: #{tpu_custom_call.1} parent=1 // pred_region
      %68 = dma.done [#allocation6], 16384
    $region33: #{tpu_custom_call.1} parent=1 // pred_fallthru
      _
    // Predicated region
    $region34: #{tpu_custom_call.1} parent=1 // pred_check
      _
    $region35: #{tpu_custom_call.1} parent=1 // pred_check_branch
      %70 = sbr.rel (0) target = $region37
    $region36: #{tpu_custom_call.1} parent=1 // pred_region
      %71 = dma.done [#allocation9], 256
    $region37: #{tpu_custom_call.1} parent=1 // pred_fallthru
      _
    %v73 = vld [vmem:[#allocation2] sm:$0xff]
    %v74 = vld [vmem:[#allocation2 + $0x8] sm:$0xff]
    %v75 = vld [vmem:[#allocation2 + $0x10] sm:$0xff]
    %v76 = vld [vmem:[#allocation2 + $0x18] sm:$0xff]
    %v81 = vcombine.high %v73, %v73
    %v83 = vunpack.c.l.s4 1983009808
    %v84 = vunpack.c.0.s8 %v83
    %v85 = vlaneseq
    %v86 = vshrl.u32 %v85, 7
    %v87 = vsub.s32 %v84, %v86
    %v88 = vrot.slane %v73, %v87
    %v90 = vunpack.c.l.s4 1983009808
    %v91 = vunpack.c.0.s8 %v90
    %v92 = vlaneseq
    %v93 = vshrl.u32 %v92, 7
    %v94 = vsub.s32 %v91, %v93
    %v95 = vrot.slane %v81, %v94
    %v96 = vcombine.high %v88, %v88
    %v97 = vcombine.high %v95, %v95
    %v98 = vcombine.high %v74, %v74
    %v100 = vunpack.c.l.s4 1983009808
    %v101 = vunpack.c.0.s8 %v100
    %v102 = vlaneseq
    %v103 = vshrl.u32 %v102, 7
    %v104 = vsub.s32 %v101, %v103
    %v105 = vrot.slane %v74, %v104
    %v107 = vunpack.c.l.s4 1983009808
    %v108 = vunpack.c.0.s8 %v107
    %v109 = vlaneseq
    %v110 = vshrl.u32 %v109, 7
    %v111 = vsub.s32 %v108, %v110
    %v112 = vrot.slane %v98, %v111
    %v113 = vcombine.high %v105, %v105
    %v114 = vcombine.high %v112, %v112
    %v115 = vcombine.high %v75, %v75
    %v117 = vunpack.c.l.s4 1983009808
    %v118 = vunpack.c.0.s8 %v117
    %v119 = vlaneseq
    %v120 = vshrl.u32 %v119, 7
    %v121 = vsub.s32 %v118, %v120
    %v122 = vrot.slane %v75, %v121
    %v124 = vunpack.c.l.s4 1983009808
    %v125 = vunpack.c.0.s8 %v124
    %v126 = vlaneseq
    %v127 = vshrl.u32 %v126, 7
    %v128 = vsub.s32 %v125, %v127
    %v129 = vrot.slane %v115, %v128
    %v130 = vcombine.high %v122, %v122
    %v131 = vcombine.high %v129, %v129
    %v132 = vcombine.high %v76, %v76
    %v134 = vunpack.c.l.s4 1983009808
    %v135 = vunpack.c.0.s8 %v134
    %v136 = vlaneseq
    %v137 = vshrl.u32 %v136, 7
    %v138 = vsub.s32 %v135, %v137
    %v139 = vrot.slane %v76, %v138
    %v141 = vunpack.c.l.s4 1983009808
    %v142 = vunpack.c.0.s8 %v141
    %v143 = vlaneseq
    %v144 = vshrl.u32 %v143, 7
    %v145 = vsub.s32 %v142, %v144
    %v146 = vrot.slane %v132, %v145
    %v147 = vcombine.high %v139, %v139
    %v148 = vcombine.high %v146, %v146
    %v165 = vpack.c.bf16 %v88, %v88
    %v166 = vpack.c.bf16 %v96, %v96
    %v167 = vpack.c.bf16 %v95, %v95
    %v168 = vpack.c.bf16 %v97, %v97
    %v169 = vpack.c.bf16 %v105, %v105
    %v170 = vpack.c.bf16 %v113, %v113
    %v171 = vpack.c.bf16 %v112, %v112
    %v172 = vpack.c.bf16 %v114, %v114
    %v173 = vpack.c.bf16 %v122, %v122
    %v174 = vpack.c.bf16 %v130, %v130
    %v175 = vpack.c.bf16 %v129, %v129
    %v176 = vpack.c.bf16 %v131, %v131
    %v177 = vpack.c.bf16 %v139, %v139
    %v178 = vpack.c.bf16 %v147, %v147
    %v179 = vpack.c.bf16 %v146, %v146
    %v180 = vpack.c.bf16 %v148, %v148
    %v181 = vld [vmem:[#allocation5] sm:$0xf]
    %v182 = vld [vmem:[#allocation5 + $0x4] sm:$0xf]
    %v183 = vld [vmem:[#allocation5 + $0x8] sm:$0xf]
    %v184 = vld [vmem:[#allocation5 + $0xc] sm:$0xf]
    %v185 = vld [vmem:[#allocation5 + $0x10] sm:$0xf]
    %v186 = vld [vmem:[#allocation5 + $0x14] sm:$0xf]
    %v187 = vld [vmem:[#allocation5 + $0x18] sm:$0xf]
    %v188 = vld [vmem:[#allocation5 + $0x1c] sm:$0xf]
    %v189 = vld [vmem:[#allocation5 + $0x20] sm:$0xf]
    %v190 = vld [vmem:[#allocation5 + $0x24] sm:$0xf]
    %v191 = vld [vmem:[#allocation5 + $0x28] sm:$0xf]
    %v192 = vld [vmem:[#allocation5 + $0x2c] sm:$0xf]
    %v193 = vld [vmem:[#allocation5 + $0x30] sm:$0xf]
    %v194 = vld [vmem:[#allocation5 + $0x34] sm:$0xf]
    %v195 = vld [vmem:[#allocation5 + $0x38] sm:$0xf]
    %v196 = vld [vmem:[#allocation5 + $0x3c] sm:$0xf]
    %v197 = vld [vmem:[#allocation5 + $0x40] sm:$0xf]
    %v198 = vld [vmem:[#allocation5 + $0x44] sm:$0xf]
    %v199 = vld [vmem:[#allocation5 + $0x48] sm:$0xf]
    %v200 = vld [vmem:[#allocation5 + $0x4c] sm:$0xf]
    %v201 = vld [vmem:[#allocation5 + $0x50] sm:$0xf]
    %v202 = vld [vmem:[#allocation5 + $0x54] sm:$0xf]
    %v203 = vld [vmem:[#allocation5 + $0x58] sm:$0xf]
    %v204 = vld [vmem:[#allocation5 + $0x5c] sm:$0xf]
    %v205 = vld [vmem:[#allocation5 + $0x60] sm:$0xf]
    %v206 = vld [vmem:[#allocation5 + $0x64] sm:$0xf]
    %v207 = vld [vmem:[#allocation5 + $0x68] sm:$0xf]
    %v208 = vld [vmem:[#allocation5 + $0x6c] sm:$0xf]
    %v209 = vld [vmem:[#allocation5 + $0x70] sm:$0xf]
    %v210 = vld [vmem:[#allocation5 + $0x74] sm:$0xf]
    %v211 = vld [vmem:[#allocation5 + $0x78] sm:$0xf]
    %v212 = vld [vmem:[#allocation5 + $0x7c] sm:$0xf]
    %v213 = vld [vmem:[#allocation5 + $0x80] sm:$0xf]
    %v214 = vld [vmem:[#allocation5 + $0x84] sm:$0xf]
    %v215 = vld [vmem:[#allocation5 + $0x88] sm:$0xf]
    %v216 = vld [vmem:[#allocation5 + $0x8c] sm:$0xf]
    %v217 = vld [vmem:[#allocation5 + $0x90] sm:$0xf]
    %v218 = vld [vmem:[#allocation5 + $0x94] sm:$0xf]
    %v219 = vld [vmem:[#allocation5 + $0x98] sm:$0xf]
    %v220 = vld [vmem:[#allocation5 + $0x9c] sm:$0xf]
    %v221 = vld [vmem:[#allocation5 + $0xa0] sm:$0xf]
    %v222 = vld [vmem:[#allocation5 + $0xa4] sm:$0xf]
    %v223 = vld [vmem:[#allocation5 + $0xa8] sm:$0xf]
    %v224 = vld [vmem:[#allocation5 + $0xac] sm:$0xf]
    %v225 = vld [vmem:[#allocation5 + $0xb0] sm:$0xf]
    %v226 = vld [vmem:[#allocation5 + $0xb4] sm:$0xf]
    %v227 = vld [vmem:[#allocation5 + $0xb8] sm:$0xf]
    %v228 = vld [vmem:[#allocation5 + $0xbc] sm:$0xf]
    %v229 = vld [vmem:[#allocation5 + $0xc0] sm:$0xf]
    %v230 = vld [vmem:[#allocation5 + $0xc4] sm:$0xf]
    %v231 = vld [vmem:[#allocation5 + $0xc8] sm:$0xf]
    %v232 = vld [vmem:[#allocation5 + $0xcc] sm:$0xf]
    %v233 = vld [vmem:[#allocation5 + $0xd0] sm:$0xf]
    %v234 = vld [vmem:[#allocation5 + $0xd4] sm:$0xf]
    %v235 = vld [vmem:[#allocation5 + $0xd8] sm:$0xf]
    %v236 = vld [vmem:[#allocation5 + $0xdc] sm:$0xf]
    %v237 = vld [vmem:[#allocation5 + $0xe0] sm:$0xf]
    %v238 = vld [vmem:[#allocation5 + $0xe4] sm:$0xf]
    %v239 = vld [vmem:[#allocation5 + $0xe8] sm:$0xf]
    %v240 = vld [vmem:[#allocation5 + $0xec] sm:$0xf]
    %v241 = vld [vmem:[#allocation5 + $0xf0] sm:$0xf]
    %v242 = vld [vmem:[#allocation5 + $0xf4] sm:$0xf]
    %v243 = vld [vmem:[#allocation5 + $0xf8] sm:$0xf]
    %v244 = vld [vmem:[#allocation5 + $0xfc] sm:$0xf]
    %v245 = vld [vmem:[#allocation5 + $0x100] sm:$0xf]
    %v246 = vld [vmem:[#allocation5 + $0x104] sm:$0xf]
    %v247 = vld [vmem:[#allocation5 + $0x108] sm:$0xf]
    %v248 = vld [vmem:[#allocation5 + $0x10c] sm:$0xf]
    %v249 = vld [vmem:[#allocation5 + $0x110] sm:$0xf]
    %v250 = vld [vmem:[#allocation5 + $0x114] sm:$0xf]
    %v251 = vld [vmem:[#allocation5 + $0x118] sm:$0xf]
    %v252 = vld [vmem:[#allocation5 + $0x11c] sm:$0xf]
    %v253 = vld [vmem:[#allocation5 + $0x120] sm:$0xf]
    %v254 = vld [vmem:[#allocation5 + $0x124] sm:$0xf]
    %v255 = vld [vmem:[#allocation5 + $0x128] sm:$0xf]
    %v256 = vld [vmem:[#allocation5 + $0x12c] sm:$0xf]
    %v257 = vld [vmem:[#allocation5 + $0x130] sm:$0xf]
    %v258 = vld [vmem:[#allocation5 + $0x134] sm:$0xf]
    %v259 = vld [vmem:[#allocation5 + $0x138] sm:$0xf]
    %v260 = vld [vmem:[#allocation5 + $0x13c] sm:$0xf]
    %v261 = vld [vmem:[#allocation5 + $0x140] sm:$0xf]
    %v262 = vld [vmem:[#allocation5 + $0x144] sm:$0xf]
    %v263 = vld [vmem:[#allocation5 + $0x148] sm:$0xf]
    %v264 = vld [vmem:[#allocation5 + $0x14c] sm:$0xf]
    %v265 = vld [vmem:[#allocation5 + $0x150] sm:$0xf]
    %v266 = vld [vmem:[#allocation5 + $0x154] sm:$0xf]
    %v267 = vld [vmem:[#allocation5 + $0x158] sm:$0xf]
    %v268 = vld [vmem:[#allocation5 + $0x15c] sm:$0xf]
    %v269 = vld [vmem:[#allocation5 + $0x160] sm:$0xf]
    %v270 = vld [vmem:[#allocation5 + $0x164] sm:$0xf]
    %v271 = vld [vmem:[#allocation5 + $0x168] sm:$0xf]
    %v272 = vld [vmem:[#allocation5 + $0x16c] sm:$0xf]
    %v273 = vld [vmem:[#allocation5 + $0x170] sm:$0xf]
    %v274 = vld [vmem:[#allocation5 + $0x174] sm:$0xf]
    %v275 = vld [vmem:[#allocation5 + $0x178] sm:$0xf]
    %v276 = vld [vmem:[#allocation5 + $0x17c] sm:$0xf]
    %v277 = vld [vmem:[#allocation5 + $0x180] sm:$0xf]
    %v278 = vld [vmem:[#allocation5 + $0x184] sm:$0xf]
    %v279 = vld [vmem:[#allocation5 + $0x188] sm:$0xf]
    %v280 = vld [vmem:[#allocation5 + $0x18c] sm:$0xf]
    %v281 = vld [vmem:[#allocation5 + $0x190] sm:$0xf]
    %v282 = vld [vmem:[#allocation5 + $0x194] sm:$0xf]
    %v283 = vld [vmem:[#allocation5 + $0x198] sm:$0xf]
    %v284 = vld [vmem:[#allocation5 + $0x19c] sm:$0xf]
    %v285 = vld [vmem:[#allocation5 + $0x1a0] sm:$0xf]
    %v286 = vld [vmem:[#allocation5 + $0x1a4] sm:$0xf]
    %v287 = vld [vmem:[#allocation5 + $0x1a8] sm:$0xf]
    %v288 = vld [vmem:[#allocation5 + $0x1ac] sm:$0xf]
    %v289 = vld [vmem:[#allocation5 + $0x1b0] sm:$0xf]
    %v290 = vld [vmem:[#allocation5 + $0x1b4] sm:$0xf]
    %v291 = vld [vmem:[#allocation5 + $0x1b8] sm:$0xf]
    %v292 = vld [vmem:[#allocation5 + $0x1bc] sm:$0xf]
    %v293 = vld [vmem:[#allocation5 + $0x1c0] sm:$0xf]
    %v294 = vld [vmem:[#allocation5 + $0x1c4] sm:$0xf]
    %v295 = vld [vmem:[#allocation5 + $0x1c8] sm:$0xf]
    %v296 = vld [vmem:[#allocation5 + $0x1cc] sm:$0xf]
    %v297 = vld [vmem:[#allocation5 + $0x1d0] sm:$0xf]
    %v298 = vld [vmem:[#allocation5 + $0x1d4] sm:$0xf]
    %v299 = vld [vmem:[#allocation5 + $0x1d8] sm:$0xf]
    %v300 = vld [vmem:[#allocation5 + $0x1dc] sm:$0xf]
    %v301 = vld [vmem:[#allocation5 + $0x1e0] sm:$0xf]
    %v302 = vld [vmem:[#allocation5 + $0x1e4] sm:$0xf]
    %v303 = vld [vmem:[#allocation5 + $0x1e8] sm:$0xf]
    %v304 = vld [vmem:[#allocation5 + $0x1ec] sm:$0xf]
    %v305 = vld [vmem:[#allocation5 + $0x1f0] sm:$0xf]
    %v306 = vld [vmem:[#allocation5 + $0x1f4] sm:$0xf]
    %v307 = vld [vmem:[#allocation5 + $0x1f8] sm:$0xf]
    %v308 = vld [vmem:[#allocation5 + $0x1fc] sm:$0xf]
    %v309 = vld [vmem:[#allocation5 + $0x200] sm:$0xf]
    %v310 = vld [vmem:[#allocation5 + $0x204] sm:$0xf]
    %v311 = vld [vmem:[#allocation5 + $0x208] sm:$0xf]
    %v312 = vld [vmem:[#allocation5 + $0x20c] sm:$0xf]
    %v313 = vld [vmem:[#allocation5 + $0x210] sm:$0xf]
    %v314 = vld [vmem:[#allocation5 + $0x214] sm:$0xf]
    %v315 = vld [vmem:[#allocation5 + $0x218] sm:$0xf]
    %v316 = vld [vmem:[#allocation5 + $0x21c] sm:$0xf]
    %v317 = vld [vmem:[#allocation5 + $0x220] sm:$0xf]
    %v318 = vld [vmem:[#allocation5 + $0x224] sm:$0xf]
    %v319 = vld [vmem:[#allocation5 + $0x228] sm:$0xf]
    %v320 = vld [vmem:[#allocation5 + $0x22c] sm:$0xf]
    %v321 = vld [vmem:[#allocation5 + $0x230] sm:$0xf]
    %v322 = vld [vmem:[#allocation5 + $0x234] sm:$0xf]
    %v323 = vld [vmem:[#allocation5 + $0x238] sm:$0xf]
    %v324 = vld [vmem:[#allocation5 + $0x23c] sm:$0xf]
    %v325 = vld [vmem:[#allocation5 + $0x240] sm:$0xf]
    %v326 = vld [vmem:[#allocation5 + $0x244] sm:$0xf]
    %v327 = vld [vmem:[#allocation5 + $0x248] sm:$0xf]
    %v328 = vld [vmem:[#allocation5 + $0x24c] sm:$0xf]
    %v329 = vld [vmem:[#allocation5 + $0x250] sm:$0xf]
    %v330 = vld [vmem:[#allocation5 + $0x254] sm:$0xf]
    %v331 = vld [vmem:[#allocation5 + $0x258] sm:$0xf]
    %v332 = vld [vmem:[#allocation5 + $0x25c] sm:$0xf]
    %v333 = vld [vmem:[#allocation5 + $0x260] sm:$0xf]
    %v334 = vld [vmem:[#allocation5 + $0x264] sm:$0xf]
    %v335 = vld [vmem:[#allocation5 + $0x268] sm:$0xf]
    %v336 = vld [vmem:[#allocation5 + $0x26c] sm:$0xf]
    %v337 = vld [vmem:[#allocation5 + $0x270] sm:$0xf]
    %v338 = vld [vmem:[#allocation5 + $0x274] sm:$0xf]
    %v339 = vld [vmem:[#allocation5 + $0x278] sm:$0xf]
    %v340 = vld [vmem:[#allocation5 + $0x27c] sm:$0xf]
    %v341 = vld [vmem:[#allocation5 + $0x280] sm:$0xf]
    %v342 = vld [vmem:[#allocation5 + $0x284] sm:$0xf]
    %v343 = vld [vmem:[#allocation5 + $0x288] sm:$0xf]
    %v344 = vld [vmem:[#allocation5 + $0x28c] sm:$0xf]
    %v345 = vld [vmem:[#allocation5 + $0x290] sm:$0xf]
    %v346 = vld [vmem:[#allocation5 + $0x294] sm:$0xf]
    %v347 = vld [vmem:[#allocation5 + $0x298] sm:$0xf]
    %v348 = vld [vmem:[#allocation5 + $0x29c] sm:$0xf]
    %v349 = vld [vmem:[#allocation5 + $0x2a0] sm:$0xf]
    %v350 = vld [vmem:[#allocation5 + $0x2a4] sm:$0xf]
    %v351 = vld [vmem:[#allocation5 + $0x2a8] sm:$0xf]
    %v352 = vld [vmem:[#allocation5 + $0x2ac] sm:$0xf]
    %v353 = vld [vmem:[#allocation5 + $0x2b0] sm:$0xf]
    %v354 = vld [vmem:[#allocation5 + $0x2b4] sm:$0xf]
    %v355 = vld [vmem:[#allocation5 + $0x2b8] sm:$0xf]
    %v356 = vld [vmem:[#allocation5 + $0x2bc] sm:$0xf]
    %v357 = vld [vmem:[#allocation5 + $0x2c0] sm:$0xf]
    %v358 = vld [vmem:[#allocation5 + $0x2c4] sm:$0xf]
    %v359 = vld [vmem:[#allocation5 + $0x2c8] sm:$0xf]
    %v360 = vld [vmem:[#allocation5 + $0x2cc] sm:$0xf]
    %v361 = vld [vmem:[#allocation5 + $0x2d0] sm:$0xf]
    %v362 = vld [vmem:[#allocation5 + $0x2d4] sm:$0xf]
    %v363 = vld [vmem:[#allocation5 + $0x2d8] sm:$0xf]
    %v364 = vld [vmem:[#allocation5 + $0x2dc] sm:$0xf]
    %v365 = vld [vmem:[#allocation5 + $0x2e0] sm:$0xf]
    %v366 = vld [vmem:[#allocation5 + $0x2e4] sm:$0xf]
    %v367 = vld [vmem:[#allocation5 + $0x2e8] sm:$0xf]
    %v368 = vld [vmem:[#allocation5 + $0x2ec] sm:$0xf]
    %v369 = vld [vmem:[#allocation5 + $0x2f0] sm:$0xf]
    %v370 = vld [vmem:[#allocation5 + $0x2f4] sm:$0xf]
    %v371 = vld [vmem:[#allocation5 + $0x2f8] sm:$0xf]
    %v372 = vld [vmem:[#allocation5 + $0x2fc] sm:$0xf]
    %v373 = vld [vmem:[#allocation5 + $0x300] sm:$0xf]
    %v374 = vld [vmem:[#allocation5 + $0x304] sm:$0xf]
    %v375 = vld [vmem:[#allocation5 + $0x308] sm:$0xf]
    %v376 = vld [vmem:[#allocation5 + $0x30c] sm:$0xf]
    %v377 = vld [vmem:[#allocation5 + $0x310] sm:$0xf]
    %v378 = vld [vmem:[#allocation5 + $0x314] sm:$0xf]
    %v379 = vld [vmem:[#allocation5 + $0x318] sm:$0xf]
    %v380 = vld [vmem:[#allocation5 + $0x31c] sm:$0xf]
    %v381 = vld [vmem:[#allocation5 + $0x320] sm:$0xf]
    %v382 = vld [vmem:[#allocation5 + $0x324] sm:$0xf]
    %v383 = vld [vmem:[#allocation5 + $0x328] sm:$0xf]
    %v384 = vld [vmem:[#allocation5 + $0x32c] sm:$0xf]
    %v385 = vld [vmem:[#allocation5 + $0x330] sm:$0xf]
    %v386 = vld [vmem:[#allocation5 + $0x334] sm:$0xf]
    %v387 = vld [vmem:[#allocation5 + $0x338] sm:$0xf]
    %v388 = vld [vmem:[#allocation5 + $0x33c] sm:$0xf]
    %v389 = vld [vmem:[#allocation5 + $0x340] sm:$0xf]
    %v390 = vld [vmem:[#allocation5 + $0x344] sm:$0xf]
    %v391 = vld [vmem:[#allocation5 + $0x348] sm:$0xf]
    %v392 = vld [vmem:[#allocation5 + $0x34c] sm:$0xf]
    %v393 = vld [vmem:[#allocation5 + $0x350] sm:$0xf]
    %v394 = vld [vmem:[#allocation5 + $0x354] sm:$0xf]
    %v395 = vld [vmem:[#allocation5 + $0x358] sm:$0xf]
    %v396 = vld [vmem:[#allocation5 + $0x35c] sm:$0xf]
    %v397 = vld [vmem:[#allocation5 + $0x360] sm:$0xf]
    %v398 = vld [vmem:[#allocation5 + $0x364] sm:$0xf]
    %v399 = vld [vmem:[#allocation5 + $0x368] sm:$0xf]
    %v400 = vld [vmem:[#allocation5 + $0x36c] sm:$0xf]
    %v401 = vld [vmem:[#allocation5 + $0x370] sm:$0xf]
    %v402 = vld [vmem:[#allocation5 + $0x374] sm:$0xf]
    %v403 = vld [vmem:[#allocation5 + $0x378] sm:$0xf]
    %v404 = vld [vmem:[#allocation5 + $0x37c] sm:$0xf]
    %v405 = vld [vmem:[#allocation5 + $0x380] sm:$0xf]
    %v406 = vld [vmem:[#allocation5 + $0x384] sm:$0xf]
    %v407 = vld [vmem:[#allocation5 + $0x388] sm:$0xf]
    %v408 = vld [vmem:[#allocation5 + $0x38c] sm:$0xf]
    %v409 = vld [vmem:[#allocation5 + $0x390] sm:$0xf]
    %v410 = vld [vmem:[#allocation5 + $0x394] sm:$0xf]
    %v411 = vld [vmem:[#allocation5 + $0x398] sm:$0xf]
    %v412 = vld [vmem:[#allocation5 + $0x39c] sm:$0xf]
    %v413 = vld [vmem:[#allocation5 + $0x3a0] sm:$0xf]
    %v414 = vld [vmem:[#allocation5 + $0x3a4] sm:$0xf]
    %v415 = vld [vmem:[#allocation5 + $0x3a8] sm:$0xf]
    %v416 = vld [vmem:[#allocation5 + $0x3ac] sm:$0xf]
    %v417 = vld [vmem:[#allocation5 + $0x3b0] sm:$0xf]
    %v418 = vld [vmem:[#allocation5 + $0x3b4] sm:$0xf]
    %v419 = vld [vmem:[#allocation5 + $0x3b8] sm:$0xf]
    %v420 = vld [vmem:[#allocation5 + $0x3bc] sm:$0xf]
    %v421 = vld [vmem:[#allocation5 + $0x3c0] sm:$0xf]
    %v422 = vld [vmem:[#allocation5 + $0x3c4] sm:$0xf]
    %v423 = vld [vmem:[#allocation5 + $0x3c8] sm:$0xf]
    %v424 = vld [vmem:[#allocation5 + $0x3cc] sm:$0xf]
    %v425 = vld [vmem:[#allocation5 + $0x3d0] sm:$0xf]
    %v426 = vld [vmem:[#allocation5 + $0x3d4] sm:$0xf]
    %v427 = vld [vmem:[#allocation5 + $0x3d8] sm:$0xf]
    %v428 = vld [vmem:[#allocation5 + $0x3dc] sm:$0xf]
    %v429 = vld [vmem:[#allocation5 + $0x3e0] sm:$0xf]
    %v430 = vld [vmem:[#allocation5 + $0x3e4] sm:$0xf]
    %v431 = vld [vmem:[#allocation5 + $0x3e8] sm:$0xf]
    %v432 = vld [vmem:[#allocation5 + $0x3ec] sm:$0xf]
    %v433 = vld [vmem:[#allocation5 + $0x3f0] sm:$0xf]
    %v434 = vld [vmem:[#allocation5 + $0x3f4] sm:$0xf]
    %v435 = vld [vmem:[#allocation5 + $0x3f8] sm:$0xf]
    %v436 = vld [vmem:[#allocation5 + $0x3fc] sm:$0xf]
    %v437 = vld [vmem:[%s2] sm:$0x1]
    %v439 = vlaneseq
    %v440 = vshrl.u32 %v439, 7
    %v441 = vsub.s32 0, %v440
    %v442 = vrot.slane %v437, %v441
    %v700 = vunpack.c.l.b16 %v181
    %v701 = vunpack.c.l.b16 %v182
    %v702 = vunpack.c.l.b16 %v183
    %v703 = vunpack.c.l.b16 %v184
    %v704 = vunpack.c.l.b16 %v185
    %v705 = vunpack.c.l.b16 %v186
    %v706 = vunpack.c.l.b16 %v187
    %v707 = vunpack.c.l.b16 %v188
    %v708 = vunpack.c.l.b16 %v189
    %v709 = vunpack.c.l.b16 %v190
    %v710 = vunpack.c.l.b16 %v191
    %v711 = vunpack.c.l.b16 %v192
    %v712 = vunpack.c.l.b16 %v193
    %v713 = vunpack.c.l.b16 %v194
    %v714 = vunpack.c.l.b16 %v195
    %v715 = vunpack.c.l.b16 %v196
    %v716 = vunpack.c.l.b16 %v197
    %v717 = vunpack.c.l.b16 %v198
    %v718 = vunpack.c.l.b16 %v199
    %v719 = vunpack.c.l.b16 %v200
    %v720 = vunpack.c.l.b16 %v201
    %v721 = vunpack.c.l.b16 %v202
    %v722 = vunpack.c.l.b16 %v203
    %v723 = vunpack.c.l.b16 %v204
    %v724 = vunpack.c.l.b16 %v205
    %v725 = vunpack.c.l.b16 %v206
    %v726 = vunpack.c.l.b16 %v207
    %v727 = vunpack.c.l.b16 %v208
    %v728 = vunpack.c.l.b16 %v209
    %v729 = vunpack.c.l.b16 %v210
    %v730 = vunpack.c.l.b16 %v211
    %v731 = vunpack.c.l.b16 %v212
    %v732 = vunpack.c.l.b16 %v213
    %v733 = vunpack.c.l.b16 %v214
    %v734 = vunpack.c.l.b16 %v215
    %v735 = vunpack.c.l.b16 %v216
    %v736 = vunpack.c.l.b16 %v217
    %v737 = vunpack.c.l.b16 %v218
    %v738 = vunpack.c.l.b16 %v219
    %v739 = vunpack.c.l.b16 %v220
    %v740 = vunpack.c.l.b16 %v221
    %v741 = vunpack.c.l.b16 %v222
    %v742 = vunpack.c.l.b16 %v223
    %v743 = vunpack.c.l.b16 %v224
    %v744 = vunpack.c.l.b16 %v225
    %v745 = vunpack.c.l.b16 %v226
    %v746 = vunpack.c.l.b16 %v227
    %v747 = vunpack.c.l.b16 %v228
    %v748 = vunpack.c.l.b16 %v229
    %v749 = vunpack.c.l.b16 %v230
    %v750 = vunpack.c.l.b16 %v231
    %v751 = vunpack.c.l.b16 %v232
    %v752 = vunpack.c.l.b16 %v233
    %v753 = vunpack.c.l.b16 %v234
    %v754 = vunpack.c.l.b16 %v235
    %v755 = vunpack.c.l.b16 %v236
    %v756 = vunpack.c.l.b16 %v237
    %v757 = vunpack.c.l.b16 %v238
    %v758 = vunpack.c.l.b16 %v239
    %v759 = vunpack.c.l.b16 %v240
    %v760 = vunpack.c.l.b16 %v241
    %v761 = vunpack.c.l.b16 %v242
    %v762 = vunpack.c.l.b16 %v243
    %v763 = vunpack.c.l.b16 %v244
    %v764 = vunpack.c.l.b16 %v245
    %v765 = vunpack.c.l.b16 %v246
    %v766 = vunpack.c.l.b16 %v247
    %v767 = vunpack.c.l.b16 %v248
    %v768 = vunpack.c.l.b16 %v249
    %v769 = vunpack.c.l.b16 %v250
    %v770 = vunpack.c.l.b16 %v251
    %v771 = vunpack.c.l.b16 %v252
    %v772 = vunpack.c.l.b16 %v253
    %v773 = vunpack.c.l.b16 %v254
    %v774 = vunpack.c.l.b16 %v255
    %v775 = vunpack.c.l.b16 %v256
    %v776 = vunpack.c.l.b16 %v257
    %v777 = vunpack.c.l.b16 %v258
    %v778 = vunpack.c.l.b16 %v259
    %v779 = vunpack.c.l.b16 %v260
    %v780 = vunpack.c.l.b16 %v261
    %v781 = vunpack.c.l.b16 %v262
    %v782 = vunpack.c.l.b16 %v263
    %v783 = vunpack.c.l.b16 %v264
    %v784 = vunpack.c.l.b16 %v265
    %v785 = vunpack.c.l.b16 %v266
    %v786 = vunpack.c.l.b16 %v267
    %v787 = vunpack.c.l.b16 %v268
    %v788 = vunpack.c.l.b16 %v269
    %v789 = vunpack.c.l.b16 %v270
    %v790 = vunpack.c.l.b16 %v271
    %v791 = vunpack.c.l.b16 %v272
    %v792 = vunpack.c.l.b16 %v273
    %v793 = vunpack.c.l.b16 %v274
    %v794 = vunpack.c.l.b16 %v275
    %v795 = vunpack.c.l.b16 %v276
    %v796 = vunpack.c.l.b16 %v277
    %v797 = vunpack.c.l.b16 %v278
    %v798 = vunpack.c.l.b16 %v279
    %v799 = vunpack.c.l.b16 %v280
    %v800 = vunpack.c.l.b16 %v281
    %v801 = vunpack.c.l.b16 %v282
    %v802 = vunpack.c.l.b16 %v283
    %v803 = vunpack.c.l.b16 %v284
    %v804 = vunpack.c.l.b16 %v285
    %v805 = vunpack.c.l.b16 %v286
    %v806 = vunpack.c.l.b16 %v287
    %v807 = vunpack.c.l.b16 %v288
    %v808 = vunpack.c.l.b16 %v289
    %v809 = vunpack.c.l.b16 %v290
    %v810 = vunpack.c.l.b16 %v291
    %v811 = vunpack.c.l.b16 %v292
    %v812 = vunpack.c.l.b16 %v293
    %v813 = vunpack.c.l.b16 %v294
    %v814 = vunpack.c.l.b16 %v295
    %v815 = vunpack.c.l.b16 %v296
    %v816 = vunpack.c.l.b16 %v297
    %v817 = vunpack.c.l.b16 %v298
    %v818 = vunpack.c.l.b16 %v299
    %v819 = vunpack.c.l.b16 %v300
    %v820 = vunpack.c.l.b16 %v301
    %v821 = vunpack.c.l.b16 %v302
    %v822 = vunpack.c.l.b16 %v303
    %v823 = vunpack.c.l.b16 %v304
    %v824 = vunpack.c.l.b16 %v305
    %v825 = vunpack.c.l.b16 %v306
    %v826 = vunpack.c.l.b16 %v307
    %v827 = vunpack.c.l.b16 %v308
    %v828 = vunpack.c.l.b16 %v309
    %v829 = vunpack.c.l.b16 %v310
    %v830 = vunpack.c.l.b16 %v311
    %v831 = vunpack.c.l.b16 %v312
    %v832 = vunpack.c.l.b16 %v313
    %v833 = vunpack.c.l.b16 %v314
    %v834 = vunpack.c.l.b16 %v315
    %v835 = vunpack.c.l.b16 %v316
    %v836 = vunpack.c.l.b16 %v317
    %v837 = vunpack.c.l.b16 %v318
    %v838 = vunpack.c.l.b16 %v319
    %v839 = vunpack.c.l.b16 %v320
    %v840 = vunpack.c.l.b16 %v321
    %v841 = vunpack.c.l.b16 %v322
    %v842 = vunpack.c.l.b16 %v323
    %v843 = vunpack.c.l.b16 %v324
    %v844 = vunpack.c.l.b16 %v325
    %v845 = vunpack.c.l.b16 %v326
    %v846 = vunpack.c.l.b16 %v327
    %v847 = vunpack.c.l.b16 %v328
    %v848 = vunpack.c.l.b16 %v329
    %v849 = vunpack.c.l.b16 %v330
    %v850 = vunpack.c.l.b16 %v331
    %v851 = vunpack.c.l.b16 %v332
    %v852 = vunpack.c.l.b16 %v333
    %v853 = vunpack.c.l.b16 %v334
    %v854 = vunpack.c.l.b16 %v335
    %v855 = vunpack.c.l.b16 %v336
    %v856 = vunpack.c.l.b16 %v337
    %v857 = vunpack.c.l.b16 %v338
    %v858 = vunpack.c.l.b16 %v339
    %v859 = vunpack.c.l.b16 %v340
    %v860 = vunpack.c.l.b16 %v341
    %v861 = vunpack.c.l.b16 %v342
    %v862 = vunpack.c.l.b16 %v343
    %v863 = vunpack.c.l.b16 %v344
    %v864 = vunpack.c.l.b16 %v345
    %v865 = vunpack.c.l.b16 %v346
    %v866 = vunpack.c.l.b16 %v347
    %v867 = vunpack.c.l.b16 %v348
    %v868 = vunpack.c.l.b16 %v349
    %v869 = vunpack.c.l.b16 %v350
    %v870 = vunpack.c.l.b16 %v351
    %v871 = vunpack.c.l.b16 %v352
    %v872 = vunpack.c.l.b16 %v353
    %v873 = vunpack.c.l.b16 %v354
    %v874 = vunpack.c.l.b16 %v355
    %v875 = vunpack.c.l.b16 %v356
    %v876 = vunpack.c.l.b16 %v357
    %v877 = vunpack.c.l.b16 %v358
    %v878 = vunpack.c.l.b16 %v359
    %v879 = vunpack.c.l.b16 %v360
    %v880 = vunpack.c.l.b16 %v361
    %v881 = vunpack.c.l.b16 %v362
    %v882 = vunpack.c.l.b16 %v363
    %v883 = vunpack.c.l.b16 %v364
    %v884 = vunpack.c.l.b16 %v365
    %v885 = vunpack.c.l.b16 %v366
    %v886 = vunpack.c.l.b16 %v367
    %v887 = vunpack.c.l.b16 %v368
    %v888 = vunpack.c.l.b16 %v369
    %v889 = vunpack.c.l.b16 %v370
    %v890 = vunpack.c.l.b16 %v371
    %v891 = vunpack.c.l.b16 %v372
    %v892 = vunpack.c.l.b16 %v373
    %v893 = vunpack.c.l.b16 %v374
    %v894 = vunpack.c.l.b16 %v375
    %v895 = vunpack.c.l.b16 %v376
    %v896 = vunpack.c.l.b16 %v377
    %v897 = vunpack.c.l.b16 %v378
    %v898 = vunpack.c.l.b16 %v379
    %v899 = vunpack.c.l.b16 %v380
    %v900 = vunpack.c.l.b16 %v381
    %v901 = vunpack.c.l.b16 %v382
    %v902 = vunpack.c.l.b16 %v383
    %v903 = vunpack.c.l.b16 %v384
    %v904 = vunpack.c.l.b16 %v385
    %v905 = vunpack.c.l.b16 %v386
    %v906 = vunpack.c.l.b16 %v387
    %v907 = vunpack.c.l.b16 %v388
    %v908 = vunpack.c.l.b16 %v389
    %v909 = vunpack.c.l.b16 %v390
    %v910 = vunpack.c.l.b16 %v391
    %v911 = vunpack.c.l.b16 %v392
    %v912 = vunpack.c.l.b16 %v393
    %v913 = vunpack.c.l.b16 %v394
    %v914 = vunpack.c.l.b16 %v395
    %v915 = vunpack.c.l.b16 %v396
    %v916 = vunpack.c.l.b16 %v397
    %v917 = vunpack.c.l.b16 %v398
    %v918 = vunpack.c.l.b16 %v399
    %v919 = vunpack.c.l.b16 %v400
    %v920 = vunpack.c.l.b16 %v401
    %v921 = vunpack.c.l.b16 %v402
    %v922 = vunpack.c.l.b16 %v403
    %v923 = vunpack.c.l.b16 %v404
    %v924 = vunpack.c.l.b16 %v405
    %v925 = vunpack.c.l.b16 %v406
    %v926 = vunpack.c.l.b16 %v407
    %v927 = vunpack.c.l.b16 %v408
    %v928 = vunpack.c.l.b16 %v409
    %v929 = vunpack.c.l.b16 %v410
    %v930 = vunpack.c.l.b16 %v411
    %v931 = vunpack.c.l.b16 %v412
    %v932 = vunpack.c.l.b16 %v413
    %v933 = vunpack.c.l.b16 %v414
    %v934 = vunpack.c.l.b16 %v415
    %v935 = vunpack.c.l.b16 %v416
    %v936 = vunpack.c.l.b16 %v417
    %v937 = vunpack.c.l.b16 %v418
    %v938 = vunpack.c.l.b16 %v419
    %v939 = vunpack.c.l.b16 %v420
    %v940 = vunpack.c.l.b16 %v421
    %v941 = vunpack.c.l.b16 %v422
    %v942 = vunpack.c.l.b16 %v423
    %v943 = vunpack.c.l.b16 %v424
    %v944 = vunpack.c.l.b16 %v425
    %v945 = vunpack.c.l.b16 %v426
    %v946 = vunpack.c.l.b16 %v427
    %v947 = vunpack.c.l.b16 %v428
    %v948 = vunpack.c.l.b16 %v429
    %v949 = vunpack.c.l.b16 %v430
    %v950 = vunpack.c.l.b16 %v431
    %v951 = vunpack.c.l.b16 %v432
    %v952 = vunpack.c.l.b16 %v433
    %v953 = vunpack.c.l.b16 %v434
    %v954 = vunpack.c.l.b16 %v435
    %v955 = vunpack.c.l.b16 %v436
    %v956 = vpack.c.b16 %v701, %v700
    %v957 = vpack.c.b16 %v703, %v702
    %v958 = vpack.c.b16 %v705, %v704
    %v959 = vpack.c.b16 %v707, %v706
    %v960 = vpack.c.b16 %v709, %v708
    %v961 = vpack.c.b16 %v711, %v710
    %v962 = vpack.c.b16 %v713, %v712
    %v963 = vpack.c.b16 %v715, %v714
    %v964 = vpack.c.b16 %v717, %v716
    %v965 = vpack.c.b16 %v719, %v718
    %v966 = vpack.c.b16 %v721, %v720
    %v967 = vpack.c.b16 %v723, %v722
    %v968 = vpack.c.b16 %v725, %v724
    %v969 = vpack.c.b16 %v727, %v726
    %v970 = vpack.c.b16 %v729, %v728
    %v971 = vpack.c.b16 %v731, %v730
    %v972 = vpack.c.b16 %v733, %v732
    %v973 = vpack.c.b16 %v735, %v734
    %v974 = vpack.c.b16 %v737, %v736
    %v975 = vpack.c.b16 %v739, %v738
    %v976 = vpack.c.b16 %v741, %v740
    %v977 = vpack.c.b16 %v743, %v742
    %v978 = vpack.c.b16 %v745, %v744
    %v979 = vpack.c.b16 %v747, %v746
    %v980 = vpack.c.b16 %v749, %v748
    %v981 = vpack.c.b16 %v751, %v750
    %v982 = vpack.c.b16 %v753, %v752
    %v983 = vpack.c.b16 %v755, %v754
    %v984 = vpack.c.b16 %v757, %v756
    %v985 = vpack.c.b16 %v759, %v758
    %v986 = vpack.c.b16 %v761, %v760
    %v987 = vpack.c.b16 %v763, %v762
    %v988 = vpack.c.b16 %v765, %v764
    %v989 = vpack.c.b16 %v767, %v766
    %v990 = vpack.c.b16 %v769, %v768
    %v991 = vpack.c.b16 %v771, %v770
    %v992 = vpack.c.b16 %v773, %v772
    %v993 = vpack.c.b16 %v775, %v774
    %v994 = vpack.c.b16 %v777, %v776
    %v995 = vpack.c.b16 %v779, %v778
    %v996 = vpack.c.b16 %v781, %v780
    %v997 = vpack.c.b16 %v783, %v782
    %v998 = vpack.c.b16 %v785, %v784
    %v999 = vpack.c.b16 %v787, %v786
    %v1000 = vpack.c.b16 %v789, %v788
    %v1001 = vpack.c.b16 %v791, %v790
    %v1002 = vpack.c.b16 %v793, %v792
    %v1003 = vpack.c.b16 %v795, %v794
    %v1004 = vpack.c.b16 %v797, %v796
    %v1005 = vpack.c.b16 %v799, %v798
    %v1006 = vpack.c.b16 %v801, %v800
    %v1007 = vpack.c.b16 %v803, %v802
    %v1008 = vpack.c.b16 %v805, %v804
    %v1009 = vpack.c.b16 %v807, %v806
    %v1010 = vpack.c.b16 %v809, %v808
    %v1011 = vpack.c.b16 %v811, %v810
    %v1012 = vpack.c.b16 %v813, %v812
    %v1013 = vpack.c.b16 %v815, %v814
    %v1014 = vpack.c.b16 %v817, %v816
    %v1015 = vpack.c.b16 %v819, %v818
    %v1016 = vpack.c.b16 %v821, %v820
    %v1017 = vpack.c.b16 %v823, %v822
    %v1018 = vpack.c.b16 %v825, %v824
    %v1019 = vpack.c.b16 %v827, %v826
    %v1020 = vpack.c.b16 %v829, %v828
    %v1021 = vpack.c.b16 %v831, %v830
    %v1022 = vpack.c.b16 %v833, %v832
    %v1023 = vpack.c.b16 %v835, %v834
    %v1024 = vpack.c.b16 %v837, %v836
    %v1025 = vpack.c.b16 %v839, %v838
    %v1026 = vpack.c.b16 %v841, %v840
    %v1027 = vpack.c.b16 %v843, %v842
    %v1028 = vpack.c.b16 %v845, %v844
    %v1029 = vpack.c.b16 %v847, %v846
    %v1030 = vpack.c.b16 %v849, %v848
    %v1031 = vpack.c.b16 %v851, %v850
    %v1032 = vpack.c.b16 %v853, %v852
    %v1033 = vpack.c.b16 %v855, %v854
    %v1034 = vpack.c.b16 %v857, %v856
    %v1035 = vpack.c.b16 %v859, %v858
    %v1036 = vpack.c.b16 %v861, %v860
    %v1037 = vpack.c.b16 %v863, %v862
    %v1038 = vpack.c.b16 %v865, %v864
    %v1039 = vpack.c.b16 %v867, %v866
    %v1040 = vpack.c.b16 %v869, %v868
    %v1041 = vpack.c.b16 %v871, %v870
    %v1042 = vpack.c.b16 %v873, %v872
    %v1043 = vpack.c.b16 %v875, %v874
    %v1044 = vpack.c.b16 %v877, %v876
    %v1045 = vpack.c.b16 %v879, %v878
    %v1046 = vpack.c.b16 %v881, %v880
    %v1047 = vpack.c.b16 %v883, %v882
    %v1048 = vpack.c.b16 %v885, %v884
    %v1049 = vpack.c.b16 %v887, %v886
    %v1050 = vpack.c.b16 %v889, %v888
    %v1051 = vpack.c.b16 %v891, %v890
    %v1052 = vpack.c.b16 %v893, %v892
    %v1053 = vpack.c.b16 %v895, %v894
    %v1054 = vpack.c.b16 %v897, %v896
    %v1055 = vpack.c.b16 %v899, %v898
    %v1056 = vpack.c.b16 %v901, %v900
    %v1057 = vpack.c.b16 %v903, %v902
    %v1058 = vpack.c.b16 %v905, %v904
    %v1059 = vpack.c.b16 %v907, %v906
    %v1060 = vpack.c.b16 %v909, %v908
    %v1061 = vpack.c.b16 %v911, %v910
    %v1062 = vpack.c.b16 %v913, %v912
    %v1063 = vpack.c.b16 %v915, %v914
    %v1064 = vpack.c.b16 %v917, %v916
    %v1065 = vpack.c.b16 %v919, %v918
    %v1066 = vpack.c.b16 %v921, %v920
    %v1067 = vpack.c.b16 %v923, %v922
    %v1068 = vpack.c.b16 %v925, %v924
    %v1069 = vpack.c.b16 %v927, %v926
    %v1070 = vpack.c.b16 %v929, %v928
    %v1071 = vpack.c.b16 %v931, %v930
    %v1072 = vpack.c.b16 %v933, %v932
    %v1073 = vpack.c.b16 %v935, %v934
    %v1074 = vpack.c.b16 %v937, %v936
    %v1075 = vpack.c.b16 %v939, %v938
    %v1076 = vpack.c.b16 %v941, %v940
    %v1077 = vpack.c.b16 %v943, %v942
    %v1078 = vpack.c.b16 %v945, %v944
    %v1079 = vpack.c.b16 %v947, %v946
    %v1080 = vpack.c.b16 %v949, %v948
    %v1081 = vpack.c.b16 %v951, %v950
    %v1082 = vpack.c.b16 %v953, %v952
    %v1083 = vpack.c.b16 %v955, %v954
    %1212 = vmatprep.subr.bf16.mxu0 0
    %1213 = vmatpush1.bf16.msra.mxu0 %v963
    %1214 = vmatprep.subr.bf16.mxu0 0
    %1215 = vmatpush1.bf16.msra.mxu0 %v962
    %1216 = vmatprep.subr.bf16.mxu0 0
    %1217 = vmatpush1.bf16.msra.mxu0 %v961
    %1218 = vmatprep.subr.bf16.mxu0 0
    %1219 = vmatpush1.bf16.msra.mxu0 %v960
    %1220 = vmatprep.subr.bf16.mxu0 0
    %1221 = vmatpush1.bf16.msra.mxu0 %v959
    %1222 = vmatprep.subr.bf16.mxu0 0
    %1223 = vmatpush1.bf16.msra.mxu0 %v958
    %1224 = vmatprep.subr.bf16.mxu0 0
    %1225 = vmatpush1.bf16.msra.mxu0 %v957
    %1226 = vmatprep.subr.bf16.mxu0 0
    %1227 = vmatpush1.bf16.msra.mxu0 %v956
    %1228 = vmatprep.subr.bf16.mxu0 0
    %1229 = vmatpush2.bf16.msra.mxu0 %v971
    %1230 = vmatprep.subr.bf16.mxu0 0
    %1231 = vmatpush2.bf16.msra.mxu0 %v970
    %1232 = vmatprep.subr.bf16.mxu0 0
    %1233 = vmatpush2.bf16.msra.mxu0 %v969
    %1234 = vmatprep.subr.bf16.mxu0 0
    %1235 = vmatpush2.bf16.msra.mxu0 %v968
    %1236 = vmatprep.subr.bf16.mxu0 0
    %1237 = vmatpush2.bf16.msra.mxu0 %v967
    %1238 = vmatprep.subr.bf16.mxu0 0
    %1239 = vmatpush2.bf16.msra.mxu0 %v966
    %1240 = vmatprep.subr.bf16.mxu0 0
    %1241 = vmatpush2.bf16.msra.mxu0 %v965
    %1242 = vmatprep.subr.bf16.mxu0 0
    %1243 = vmatpush2.bf16.msra.mxu0 %v964
    %1244 = vmatprep.mubr.bf16.mxu0 %v166
    %1245 = vmatmul.mubr.bf16.gmra.mxu0 %v165
    %v1246 = vpop.f32.mrf.mxu0
    %v1247 = vadd.f32 %v442, %v1246
    %v1248 = vpop.f32.mrf.mxu0
    %v1249 = vpop.f32.mrf.mxu0
    %v1250 = vpop.f32.mrf.mxu0
    %1251 = vdwg.mxu0
    %1252 = vmatprep.subr.bf16.mxu0 0
    %1253 = vmatpush1.bf16.msra.mxu0 %v979
    %1254 = vmatprep.subr.bf16.mxu0 0
    %1255 = vmatpush1.bf16.msra.mxu0 %v978
    %1256 = vmatprep.subr.bf16.mxu0 0
    %1257 = vmatpush1.bf16.msra.mxu0 %v977
    %1258 = vmatprep.subr.bf16.mxu0 0
    %1259 = vmatpush1.bf16.msra.mxu0 %v976
    %1260 = vmatprep.subr.bf16.mxu0 0
    %1261 = vmatpush1.bf16.msra.mxu0 %v975
    %1262 = vmatprep.subr.bf16.mxu0 0
    %1263 = vmatpush1.bf16.msra.mxu0 %v974
    %1264 = vmatprep.subr.bf16.mxu0 0
    %1265 = vmatpush1.bf16.msra.mxu0 %v973
    %1266 = vmatprep.subr.bf16.mxu0 0
    %1267 = vmatpush1.bf16.msra.mxu0 %v972
    %1268 = vmatprep.subr.bf16.mxu0 0
    %1269 = vmatpush2.bf16.msra.mxu0 %v987
    %1270 = vmatprep.subr.bf16.mxu0 0
    %1271 = vmatpush2.bf16.msra.mxu0 %v986
    %1272 = vmatprep.subr.bf16.mxu0 0
    %1273 = vmatpush2.bf16.msra.mxu0 %v985
    %1274 = vmatprep.subr.bf16.mxu0 0
    %1275 = vmatpush2.bf16.msra.mxu0 %v984
    %1276 = vmatprep.subr.bf16.mxu0 0
    %1277 = vmatpush2.bf16.msra.mxu0 %v983
    %1278 = vmatprep.subr.bf16.mxu0 0
    %1279 = vmatpush2.bf16.msra.mxu0 %v982
    %1280 = vmatprep.subr.bf16.mxu0 0
    %1281 = vmatpush2.bf16.msra.mxu0 %v981
    %1282 = vmatprep.subr.bf16.mxu0 0
    %1283 = vmatpush2.bf16.msra.mxu0 %v980
    %1284 = vmatprep.mubr.bf16.mxu0 %v168
    %1285 = vmatmul.mubr.bf16.gmra.mxu0 %v167
    %v1286 = vpop.f32.mrf.mxu0
    %v1287 = vadd.f32 %v1247, %v1286
    %v1288 = vpop.f32.mrf.mxu0
    %v1289 = vpop.f32.mrf.mxu0
    %v1290 = vpop.f32.mrf.mxu0
    %1291 = vdwg.mxu0
    %1292 = vmatprep.subr.bf16.mxu0 0
    %1293 = vmatpush1.bf16.msra.mxu0 %v995
    %1294 = vmatprep.subr.bf16.mxu0 0
    %1295 = vmatpush1.bf16.msra.mxu0 %v994
    %1296 = vmatprep.subr.bf16.mxu0 0
    %1297 = vmatpush1.bf16.msra.mxu0 %v993
    %1298 = vmatprep.subr.bf16.mxu0 0
    %1299 = vmatpush1.bf16.msra.mxu0 %v992
    %1300 = vmatprep.subr.bf16.mxu0 0
    %1301 = vmatpush1.bf16.msra.mxu0 %v991
    %1302 = vmatprep.subr.bf16.mxu0 0
    %1303 = vmatpush1.bf16.msra.mxu0 %v990
    %1304 = vmatprep.subr.bf16.mxu0 0
    %1305 = vmatpush1.bf16.msra.mxu0 %v989
    %1306 = vmatprep.subr.bf16.mxu0 0
    %1307 = vmatpush1.bf16.msra.mxu0 %v988
    %1308 = vmatprep.subr.bf16.mxu0 0
    %1309 = vmatpush2.bf16.msra.mxu0 %v1003
    %1310 = vmatprep.subr.bf16.mxu0 0
    %1311 = vmatpush2.bf16.msra.mxu0 %v1002
    %1312 = vmatprep.subr.bf16.mxu0 0
    %1313 = vmatpush2.bf16.msra.mxu0 %v1001
    %1314 = vmatprep.subr.bf16.mxu0 0
    %1315 = vmatpush2.bf16.msra.mxu0 %v1000
    %1316 = vmatprep.subr.bf16.mxu0 0
    %1317 = vmatpush2.bf16.msra.mxu0 %v999
    %1318 = vmatprep.subr.bf16.mxu0 0
    %1319 = vmatpush2.bf16.msra.mxu0 %v998
    %1320 = vmatprep.subr.bf16.mxu0 0
    %1321 = vmatpush2.bf16.msra.mxu0 %v997
    %1322 = vmatprep.subr.bf16.mxu0 0
    %1323 = vmatpush2.bf16.msra.mxu0 %v996
    %1324 = vmatprep.mubr.bf16.mxu0 %v170
    %1325 = vmatmul.mubr.bf16.gmra.mxu0 %v169
    %v1326 = vpop.f32.mrf.mxu0
    %v1327 = vadd.f32 %v1287, %v1326
    %v1328 = vpop.f32.mrf.mxu0
    %v1329 = vpop.f32.mrf.mxu0
    %v1330 = vpop.f32.mrf.mxu0
    %1331 = vdwg.mxu0
    %1332 = vmatprep.subr.bf16.mxu0 0
    %1333 = vmatpush1.bf16.msra.mxu0 %v1011
    %1334 = vmatprep.subr.bf16.mxu0 0
    %1335 = vmatpush1.bf16.msra.mxu0 %v1010
    %1336 = vmatprep.subr.bf16.mxu0 0
    %1337 = vmatpush1.bf16.msra.mxu0 %v1009
    %1338 = vmatprep.subr.bf16.mxu0 0
    %1339 = vmatpush1.bf16.msra.mxu0 %v1008
    %1340 = vmatprep.subr.bf16.mxu0 0
    %1341 = vmatpush1.bf16.msra.mxu0 %v1007
    %1342 = vmatprep.subr.bf16.mxu0 0
    %1343 = vmatpush1.bf16.msra.mxu0 %v1006
    %1344 = vmatprep.subr.bf16.mxu0 0
    %1345 = vmatpush1.bf16.msra.mxu0 %v1005
    %1346 = vmatprep.subr.bf16.mxu0 0
    %1347 = vmatpush1.bf16.msra.mxu0 %v1004
    %1348 = vmatprep.subr.bf16.mxu0 0
    %1349 = vmatpush2.bf16.msra.mxu0 %v1019
    %1350 = vmatprep.subr.bf16.mxu0 0
    %1351 = vmatpush2.bf16.msra.mxu0 %v1018
    %1352 = vmatprep.subr.bf16.mxu0 0
    %1353 = vmatpush2.bf16.msra.mxu0 %v1017
    %1354 = vmatprep.subr.bf16.mxu0 0
    %1355 = vmatpush2.bf16.msra.mxu0 %v1016
    %1356 = vmatprep.subr.bf16.mxu0 0
    %1357 = vmatpush2.bf16.msra.mxu0 %v1015
    %1358 = vmatprep.subr.bf16.mxu0 0
    %1359 = vmatpush2.bf16.msra.mxu0 %v1014
    %1360 = vmatprep.subr.bf16.mxu0 0
    %1361 = vmatpush2.bf16.msra.mxu0 %v1013
    %1362 = vmatprep.subr.bf16.mxu0 0
    %1363 = vmatpush2.bf16.msra.mxu0 %v1012
    %1364 = vmatprep.mubr.bf16.mxu0 %v172
    %1365 = vmatmul.mubr.bf16.gmra.mxu0 %v171
    %v1366 = vpop.f32.mrf.mxu0
    %v1367 = vadd.f32 %v1327, %v1366
    %v1368 = vpop.f32.mrf.mxu0
    %v1369 = vpop.f32.mrf.mxu0
    %v1370 = vpop.f32.mrf.mxu0
    %1371 = vdwg.mxu0
    %1372 = vmatprep.subr.bf16.mxu0 0
    %1373 = vmatpush1.bf16.msra.mxu0 %v1027
    %1374 = vmatprep.subr.bf16.mxu0 0
    %1375 = vmatpush1.bf16.msra.mxu0 %v1026
    %1376 = vmatprep.subr.bf16.mxu0 0
    %1377 = vmatpush1.bf16.msra.mxu0 %v1025
    %1378 = vmatprep.subr.bf16.mxu0 0
    %1379 = vmatpush1.bf16.msra.mxu0 %v1024
    %1380 = vmatprep.subr.bf16.mxu0 0
    %1381 = vmatpush1.bf16.msra.mxu0 %v1023
    %1382 = vmatprep.subr.bf16.mxu0 0
    %1383 = vmatpush1.bf16.msra.mxu0 %v1022
    %1384 = vmatprep.subr.bf16.mxu0 0
    %1385 = vmatpush1.bf16.msra.mxu0 %v1021
    %1386 = vmatprep.subr.bf16.mxu0 0
    %1387 = vmatpush1.bf16.msra.mxu0 %v1020
    %1388 = vmatprep.subr.bf16.mxu0 0
    %1389 = vmatpush2.bf16.msra.mxu0 %v1035
    %1390 = vmatprep.subr.bf16.mxu0 0
    %1391 = vmatpush2.bf16.msra.mxu0 %v1034
    %1392 = vmatprep.subr.bf16.mxu0 0
    %1393 = vmatpush2.bf16.msra.mxu0 %v1033
    %1394 = vmatprep.subr.bf16.mxu0 0
    %1395 = vmatpush2.bf16.msra.mxu0 %v1032
    %1396 = vmatprep.subr.bf16.mxu0 0
    %1397 = vmatpush2.bf16.msra.mxu0 %v1031
    %1398 = vmatprep.subr.bf16.mxu0 0
    %1399 = vmatpush2.bf16.msra.mxu0 %v1030
    %1400 = vmatprep.subr.bf16.mxu0 0
    %1401 = vmatpush2.bf16.msra.mxu0 %v1029
    %1402 = vmatprep.subr.bf16.mxu0 0
    %1403 = vmatpush2.bf16.msra.mxu0 %v1028
    %1404 = vmatprep.mubr.bf16.mxu0 %v174
    %1405 = vmatmul.mubr.bf16.gmra.mxu0 %v173
    %v1406 = vpop.f32.mrf.mxu0
    %v1407 = vadd.f32 %v1367, %v1406
    %v1408 = vpop.f32.mrf.mxu0
    %v1409 = vpop.f32.mrf.mxu0
    %v1410 = vpop.f32.mrf.mxu0
    %1411 = vdwg.mxu0
    %1412 = vmatprep.subr.bf16.mxu0 0
    %1413 = vmatpush1.bf16.msra.mxu0 %v1043
    %1414 = vmatprep.subr.bf16.mxu0 0
    %1415 = vmatpush1.bf16.msra.mxu0 %v1042
    %1416 = vmatprep.subr.bf16.mxu0 0
    %1417 = vmatpush1.bf16.msra.mxu0 %v1041
    %1418 = vmatprep.subr.bf16.mxu0 0
    %1419 = vmatpush1.bf16.msra.mxu0 %v1040
    %1420 = vmatprep.subr.bf16.mxu0 0
    %1421 = vmatpush1.bf16.msra.mxu0 %v1039
    %1422 = vmatprep.subr.bf16.mxu0 0
    %1423 = vmatpush1.bf16.msra.mxu0 %v1038
    %1424 = vmatprep.subr.bf16.mxu0 0
    %1425 = vmatpush1.bf16.msra.mxu0 %v1037
    %1426 = vmatprep.subr.bf16.mxu0 0
    %1427 = vmatpush1.bf16.msra.mxu0 %v1036
    %1428 = vmatprep.subr.bf16.mxu0 0
    %1429 = vmatpush2.bf16.msra.mxu0 %v1051
    %1430 = vmatprep.subr.bf16.mxu0 0
    %1431 = vmatpush2.bf16.msra.mxu0 %v1050
    %1432 = vmatprep.subr.bf16.mxu0 0
    %1433 = vmatpush2.bf16.msra.mxu0 %v1049
    %1434 = vmatprep.subr.bf16.mxu0 0
    %1435 = vmatpush2.bf16.msra.mxu0 %v1048
    %1436 = vmatprep.subr.bf16.mxu0 0
    %1437 = vmatpush2.bf16.msra.mxu0 %v1047
    %1438 = vmatprep.subr.bf16.mxu0 0
    %1439 = vmatpush2.bf16.msra.mxu0 %v1046
    %1440 = vmatprep.subr.bf16.mxu0 0
    %1441 = vmatpush2.bf16.msra.mxu0 %v1045
    %1442 = vmatprep.subr.bf16.mxu0 0
    %1443 = vmatpush2.bf16.msra.mxu0 %v1044
    %1444 = vmatprep.mubr.bf16.mxu0 %v176
    %1445 = vmatmul.mubr.bf16.gmra.mxu0 %v175
    %v1446 = vpop.f32.mrf.mxu0
    %v1447 = vadd.f32 %v1407, %v1446
    %v1448 = vpop.f32.mrf.mxu0
    %v1449 = vpop.f32.mrf.mxu0
    %v1450 = vpop.f32.mrf.mxu0
    %1451 = vdwg.mxu0
    %1452 = vmatprep.subr.bf16.mxu0 0
    %1453 = vmatpush1.bf16.msra.mxu0 %v1059
    %1454 = vmatprep.subr.bf16.mxu0 0
    %1455 = vmatpush1.bf16.msra.mxu0 %v1058
    %1456 = vmatprep.subr.bf16.mxu0 0
    %1457 = vmatpush1.bf16.msra.mxu0 %v1057
    %1458 = vmatprep.subr.bf16.mxu0 0
    %1459 = vmatpush1.bf16.msra.mxu0 %v1056
    %1460 = vmatprep.subr.bf16.mxu0 0
    %1461 = vmatpush1.bf16.msra.mxu0 %v1055
    %1462 = vmatprep.subr.bf16.mxu0 0
    %1463 = vmatpush1.bf16.msra.mxu0 %v1054
    %1464 = vmatprep.subr.bf16.mxu0 0
    %1465 = vmatpush1.bf16.msra.mxu0 %v1053
    %1466 = vmatprep.subr.bf16.mxu0 0
    %1467 = vmatpush1.bf16.msra.mxu0 %v1052
    %1468 = vmatprep.subr.bf16.mxu0 0
    %1469 = vmatpush2.bf16.msra.mxu0 %v1067
    %1470 = vmatprep.subr.bf16.mxu0 0
    %1471 = vmatpush2.bf16.msra.mxu0 %v1066
    %1472 = vmatprep.subr.bf16.mxu0 0
    %1473 = vmatpush2.bf16.msra.mxu0 %v1065
    %1474 = vmatprep.subr.bf16.mxu0 0
    %1475 = vmatpush2.bf16.msra.mxu0 %v1064
    %1476 = vmatprep.subr.bf16.mxu0 0
    %1477 = vmatpush2.bf16.msra.mxu0 %v1063
    %1478 = vmatprep.subr.bf16.mxu0 0
    %1479 = vmatpush2.bf16.msra.mxu0 %v1062
    %1480 = vmatprep.subr.bf16.mxu0 0
    %1481 = vmatpush2.bf16.msra.mxu0 %v1061
    %1482 = vmatprep.subr.bf16.mxu0 0
    %1483 = vmatpush2.bf16.msra.mxu0 %v1060
    %1484 = vmatprep.mubr.bf16.mxu0 %v178
    %1485 = vmatmul.mubr.bf16.gmra.mxu0 %v177
    %v1486 = vpop.f32.mrf.mxu0
    %v1487 = vadd.f32 %v1447, %v1486
    %v1488 = vpop.f32.mrf.mxu0
    %v1489 = vpop.f32.mrf.mxu0
    %v1490 = vpop.f32.mrf.mxu0
    %1491 = vdwg.mxu0
    %1492 = vmatprep.subr.bf16.mxu0 0
    %1493 = vmatpush1.bf16.msra.mxu0 %v1075
    %1494 = vmatprep.subr.bf16.mxu0 0
    %1495 = vmatpush1.bf16.msra.mxu0 %v1074
    %1496 = vmatprep.subr.bf16.mxu0 0
    %1497 = vmatpush1.bf16.msra.mxu0 %v1073
    %1498 = vmatprep.subr.bf16.mxu0 0
    %1499 = vmatpush1.bf16.msra.mxu0 %v1072
    %1500 = vmatprep.subr.bf16.mxu0 0
    %1501 = vmatpush1.bf16.msra.mxu0 %v1071
    %1502 = vmatprep.subr.bf16.mxu0 0
    %1503 = vmatpush1.bf16.msra.mxu0 %v1070
    %1504 = vmatprep.subr.bf16.mxu0 0
    %1505 = vmatpush1.bf16.msra.mxu0 %v1069
    %1506 = vmatprep.subr.bf16.mxu0 0
    %1507 = vmatpush1.bf16.msra.mxu0 %v1068
    %1508 = vmatprep.subr.bf16.mxu0 0
    %1509 = vmatpush2.bf16.msra.mxu0 %v1083
    %1510 = vmatprep.subr.bf16.mxu0 0
    %1511 = vmatpush2.bf16.msra.mxu0 %v1082
    %1512 = vmatprep.subr.bf16.mxu0 0
    %1513 = vmatpush2.bf16.msra.mxu0 %v1081
    %1514 = vmatprep.subr.bf16.mxu0 0
    %1515 = vmatpush2.bf16.msra.mxu0 %v1080
    %1516 = vmatprep.subr.bf16.mxu0 0
    %1517 = vmatpush2.bf16.msra.mxu0 %v1079
    %1518 = vmatprep.subr.bf16.mxu0 0
    %1519 = vmatpush2.bf16.msra.mxu0 %v1078
    %1520 = vmatprep.subr.bf16.mxu0 0
    %1521 = vmatpush2.bf16.msra.mxu0 %v1077
    %1522 = vmatprep.subr.bf16.mxu0 0
    %1523 = vmatpush2.bf16.msra.mxu0 %v1076
    %1524 = vmatprep.mubr.bf16.mxu0 %v180
    %1525 = vmatmul.mubr.bf16.gmra.mxu0 %v179
    %v1526 = vpop.f32.mrf.mxu0
    %v1527 = vadd.f32 %v1487, %v1526
    %v1528 = vpop.f32.mrf.mxu0
    %v1529 = vpop.f32.mrf.mxu0
    %v1530 = vpop.f32.mrf.mxu0
    %1531 = vdwg.mxu0
    %v1532 = vpack.c.bf16 %v1527, %v1527
    %v1533 = vld [vmem:[#allocation7] sm:$0xff]
    %v1534 = vld [vmem:[#allocation7 + $0x8] sm:$0xff]
    %v1535 = vld [vmem:[#allocation7 + $0x10] sm:$0xff]
    %v1536 = vld [vmem:[#allocation7 + $0x18] sm:$0xff]
    %v1537 = vld [vmem:[#allocation7 + $0x20] sm:$0xff]
    %v1538 = vld [vmem:[#allocation7 + $0x28] sm:$0xff]
    %v1539 = vld [vmem:[#allocation7 + $0x30] sm:$0xff]
    %v1540 = vld [vmem:[#allocation7 + $0x38] sm:$0xff]
    %v1541 = vld [vmem:[#allocation7 + $0x40] sm:$0xff]
    %v1542 = vld [vmem:[#allocation7 + $0x48] sm:$0xff]
    %v1543 = vld [vmem:[#allocation7 + $0x50] sm:$0xff]
    %v1544 = vld [vmem:[#allocation7 + $0x58] sm:$0xff]
    %v1545 = vld [vmem:[#allocation7 + $0x60] sm:$0xff]
    %v1546 = vld [vmem:[#allocation7 + $0x68] sm:$0xff]
    %v1547 = vld [vmem:[#allocation7 + $0x70] sm:$0xff]
    %v1548 = vld [vmem:[#allocation7 + $0x78] sm:$0xff]
    %v1549 = vld [vmem:[#allocation7 + $0x80] sm:$0xff]
    %v1550 = vld [vmem:[#allocation7 + $0x88] sm:$0xff]
    %v1551 = vld [vmem:[#allocation7 + $0x90] sm:$0xff]
    %v1552 = vld [vmem:[#allocation7 + $0x98] sm:$0xff]
    %v1553 = vld [vmem:[#allocation7 + $0xa0] sm:$0xff]
    %v1554 = vld [vmem:[#allocation7 + $0xa8] sm:$0xff]
    %v1555 = vld [vmem:[#allocation7 + $0xb0] sm:$0xff]
    %v1556 = vld [vmem:[#allocation7 + $0xb8] sm:$0xff]
    %v1557 = vld [vmem:[#allocation7 + $0xc0] sm:$0xff]
    %v1558 = vld [vmem:[#allocation7 + $0xc8] sm:$0xff]
    %v1559 = vld [vmem:[#allocation7 + $0xd0] sm:$0xff]
    %v1560 = vld [vmem:[#allocation7 + $0xd8] sm:$0xff]
    %v1561 = vld [vmem:[#allocation7 + $0xe0] sm:$0xff]
    %v1562 = vld [vmem:[#allocation7 + $0xe8] sm:$0xff]
    %v1563 = vld [vmem:[#allocation7 + $0xf0] sm:$0xff]
    %v1564 = vld [vmem:[#allocation7 + $0xf8] sm:$0xff]
    %v1565 = vld [vmem:[#allocation7 + $0x100] sm:$0xff]
    %v1566 = vld [vmem:[#allocation7 + $0x108] sm:$0xff]
    %v1567 = vld [vmem:[#allocation7 + $0x110] sm:$0xff]
    %v1568 = vld [vmem:[#allocation7 + $0x118] sm:$0xff]
    %v1569 = vld [vmem:[#allocation7 + $0x120] sm:$0xff]
    %v1570 = vld [vmem:[#allocation7 + $0x128] sm:$0xff]
    %v1571 = vld [vmem:[#allocation7 + $0x130] sm:$0xff]
    %v1572 = vld [vmem:[#allocation7 + $0x138] sm:$0xff]
    %v1573 = vld [vmem:[#allocation7 + $0x140] sm:$0xff]
    %v1574 = vld [vmem:[#allocation7 + $0x148] sm:$0xff]
    %v1575 = vld [vmem:[#allocation7 + $0x150] sm:$0xff]
    %v1576 = vld [vmem:[#allocation7 + $0x158] sm:$0xff]
    %v1577 = vld [vmem:[#allocation7 + $0x160] sm:$0xff]
    %v1578 = vld [vmem:[#allocation7 + $0x168] sm:$0xff]
    %v1579 = vld [vmem:[#allocation7 + $0x170] sm:$0xff]
    %v1580 = vld [vmem:[#allocation7 + $0x178] sm:$0xff]
    %v1581 = vld [vmem:[#allocation7 + $0x180] sm:$0xff]
    %v1582 = vld [vmem:[#allocation7 + $0x188] sm:$0xff]
    %v1583 = vld [vmem:[#allocation7 + $0x190] sm:$0xff]
    %v1584 = vld [vmem:[#allocation7 + $0x198] sm:$0xff]
    %v1585 = vld [vmem:[#allocation7 + $0x1a0] sm:$0xff]
    %v1586 = vld [vmem:[#allocation7 + $0x1a8] sm:$0xff]
    %v1587 = vld [vmem:[#allocation7 + $0x1b0] sm:$0xff]
    %v1588 = vld [vmem:[#allocation7 + $0x1b8] sm:$0xff]
    %v1589 = vld [vmem:[#allocation7 + $0x1c0] sm:$0xff]
    %v1590 = vld [vmem:[#allocation7 + $0x1c8] sm:$0xff]
    %v1591 = vld [vmem:[#allocation7 + $0x1d0] sm:$0xff]
    %v1592 = vld [vmem:[#allocation7 + $0x1d8] sm:$0xff]
    %v1593 = vld [vmem:[#allocation7 + $0x1e0] sm:$0xff]
    %v1594 = vld [vmem:[#allocation7 + $0x1e8] sm:$0xff]
    %v1595 = vld [vmem:[#allocation7 + $0x1f0] sm:$0xff]
    %v1596 = vld [vmem:[#allocation7 + $0x1f8] sm:$0xff]
    %v1597 = vld [vmem:[#allocation7 + $0x200] sm:$0xff]
    %v1598 = vld [vmem:[#allocation7 + $0x208] sm:$0xff]
    %v1599 = vld [vmem:[#allocation7 + $0x210] sm:$0xff]
    %v1600 = vld [vmem:[#allocation7 + $0x218] sm:$0xff]
    %v1601 = vld [vmem:[#allocation7 + $0x220] sm:$0xff]
    %v1602 = vld [vmem:[#allocation7 + $0x228] sm:$0xff]
    %v1603 = vld [vmem:[#allocation7 + $0x230] sm:$0xff]
    %v1604 = vld [vmem:[#allocation7 + $0x238] sm:$0xff]
    %v1605 = vld [vmem:[#allocation7 + $0x240] sm:$0xff]
    %v1606 = vld [vmem:[#allocation7 + $0x248] sm:$0xff]
    %v1607 = vld [vmem:[#allocation7 + $0x250] sm:$0xff]
    %v1608 = vld [vmem:[#allocation7 + $0x258] sm:$0xff]
    %v1609 = vld [vmem:[#allocation7 + $0x260] sm:$0xff]
    %v1610 = vld [vmem:[#allocation7 + $0x268] sm:$0xff]
    %v1611 = vld [vmem:[#allocation7 + $0x270] sm:$0xff]
    %v1612 = vld [vmem:[#allocation7 + $0x278] sm:$0xff]
    %v1613 = vld [vmem:[#allocation7 + $0x280] sm:$0xff]
    %v1614 = vld [vmem:[#allocation7 + $0x288] sm:$0xff]
    %v1615 = vld [vmem:[#allocation7 + $0x290] sm:$0xff]
    %v1616 = vld [vmem:[#allocation7 + $0x298] sm:$0xff]
    %v1617 = vld [vmem:[#allocation7 + $0x2a0] sm:$0xff]
    %v1618 = vld [vmem:[#allocation7 + $0x2a8] sm:$0xff]
    %v1619 = vld [vmem:[#allocation7 + $0x2b0] sm:$0xff]
    %v1620 = vld [vmem:[#allocation7 + $0x2b8] sm:$0xff]
    %v1621 = vld [vmem:[#allocation7 + $0x2c0] sm:$0xff]
    %v1622 = vld [vmem:[#allocation7 + $0x2c8] sm:$0xff]
    %v1623 = vld [vmem:[#allocation7 + $0x2d0] sm:$0xff]
    %v1624 = vld [vmem:[#allocation7 + $0x2d8] sm:$0xff]
    %v1625 = vld [vmem:[#allocation7 + $0x2e0] sm:$0xff]
    %v1626 = vld [vmem:[#allocation7 + $0x2e8] sm:$0xff]
    %v1627 = vld [vmem:[#allocation7 + $0x2f0] sm:$0xff]
    %v1628 = vld [vmem:[#allocation7 + $0x2f8] sm:$0xff]
    %v1629 = vld [vmem:[#allocation7 + $0x300] sm:$0xff]
    %v1630 = vld [vmem:[#allocation7 + $0x308] sm:$0xff]
    %v1631 = vld [vmem:[#allocation7 + $0x310] sm:$0xff]
    %v1632 = vld [vmem:[#allocation7 + $0x318] sm:$0xff]
    %v1633 = vld [vmem:[#allocation7 + $0x320] sm:$0xff]
    %v1634 = vld [vmem:[#allocation7 + $0x328] sm:$0xff]
    %v1635 = vld [vmem:[#allocation7 + $0x330] sm:$0xff]
    %v1636 = vld [vmem:[#allocation7 + $0x338] sm:$0xff]
    %v1637 = vld [vmem:[#allocation7 + $0x340] sm:$0xff]
    %v1638 = vld [vmem:[#allocation7 + $0x348] sm:$0xff]
    %v1639 = vld [vmem:[#allocation7 + $0x350] sm:$0xff]
    %v1640 = vld [vmem:[#allocation7 + $0x358] sm:$0xff]
    %v1641 = vld [vmem:[#allocation7 + $0x360] sm:$0xff]
    %v1642 = vld [vmem:[#allocation7 + $0x368] sm:$0xff]
    %v1643 = vld [vmem:[#allocation7 + $0x370] sm:$0xff]
    %v1644 = vld [vmem:[#allocation7 + $0x378] sm:$0xff]
    %v1645 = vld [vmem:[#allocation7 + $0x380] sm:$0xff]
    %v1646 = vld [vmem:[#allocation7 + $0x388] sm:$0xff]
    %v1647 = vld [vmem:[#allocation7 + $0x390] sm:$0xff]
    %v1648 = vld [vmem:[#allocation7 + $0x398] sm:$0xff]
    %v1649 = vld [vmem:[#allocation7 + $0x3a0] sm:$0xff]
    %v1650 = vld [vmem:[#allocation7 + $0x3a8] sm:$0xff]
    %v1651 = vld [vmem:[#allocation7 + $0x3b0] sm:$0xff]
    %v1652 = vld [vmem:[#allocation7 + $0x3b8] sm:$0xff]
    %v1653 = vld [vmem:[#allocation7 + $0x3c0] sm:$0xff]
    %v1654 = vld [vmem:[#allocation7 + $0x3c8] sm:$0xff]
    %v1655 = vld [vmem:[#allocation7 + $0x3d0] sm:$0xff]
    %v1656 = vld [vmem:[#allocation7 + $0x3d8] sm:$0xff]
    %v1657 = vld [vmem:[#allocation7 + $0x3e0] sm:$0xff]
    %v1658 = vld [vmem:[#allocation7 + $0x3e8] sm:$0xff]
    %v1659 = vld [vmem:[#allocation7 + $0x3f0] sm:$0xff]
    %v1660 = vld [vmem:[#allocation7 + $0x3f8] sm:$0xff]
    %v1661 = vld [vmem:[#allocation8] sm:$0xff]
    %v1662 = vld [vmem:[#allocation8 + $0x8] sm:$0xff]
    %v1665 = vlaneseq
    %v1666 = vshrl.u32 %v1665, 7
    %v1667 = vsub.s32 0, %v1666
    %v1668 = vrot.slane %v1661, %v1667
    %v1669 = vlaneseq
    %v1670 = vshrl.u32 %v1669, 7
    %v1671 = vsub.s32 1, %v1670
    %v1672 = vrot.slane %v1661, %v1671
    %v1673 = vlaneseq
    %v1674 = vshrl.u32 %v1673, 7
    %v1675 = vsub.s32 2, %v1674
    %v1676 = vrot.slane %v1661, %v1675
    %v1677 = vlaneseq
    %v1678 = vshrl.u32 %v1677, 7
    %v1679 = vsub.s32 3, %v1678
    %v1680 = vrot.slane %v1661, %v1679
    %v1681 = vlaneseq
    %v1682 = vshrl.u32 %v1681, 7
    %v1683 = vsub.s32 4, %v1682
    %v1684 = vrot.slane %v1661, %v1683
    %v1685 = vlaneseq
    %v1686 = vshrl.u32 %v1685, 7
    %v1687 = vsub.s32 5, %v1686
    %v1688 = vrot.slane %v1661, %v1687
    %v1689 = vlaneseq
    %v1690 = vshrl.u32 %v1689, 7
    %v1691 = vsub.s32 6, %v1690
    %v1692 = vrot.slane %v1661, %v1691
    %v1693 = vlaneseq
    %v1694 = vshrl.u32 %v1693, 7
    %v1695 = vsub.s32 7, %v1694
    %v1696 = vrot.slane %v1661, %v1695
    %v1697 = vlaneseq
    %v1698 = vshrl.u32 %v1697, 7
    %v1699 = vsub.s32 0, %v1698
    %v1700 = vrot.slane %v1662, %v1699
    %v1701 = vlaneseq
    %v1702 = vshrl.u32 %v1701, 7
    %v1703 = vsub.s32 1, %v1702
    %v1704 = vrot.slane %v1662, %v1703
    %v1705 = vlaneseq
    %v1706 = vshrl.u32 %v1705, 7
    %v1707 = vsub.s32 2, %v1706
    %v1708 = vrot.slane %v1662, %v1707
    %v1709 = vlaneseq
    %v1710 = vshrl.u32 %v1709, 7
    %v1711 = vsub.s32 3, %v1710
    %v1712 = vrot.slane %v1662, %v1711
    %v1713 = vlaneseq
    %v1714 = vshrl.u32 %v1713, 7
    %v1715 = vsub.s32 4, %v1714
    %v1716 = vrot.slane %v1662, %v1715
    %v1717 = vlaneseq
    %v1718 = vshrl.u32 %v1717, 7
    %v1719 = vsub.s32 5, %v1718
    %v1720 = vrot.slane %v1662, %v1719
    %v1721 = vlaneseq
    %v1722 = vshrl.u32 %v1721, 7
    %v1723 = vsub.s32 6, %v1722
    %v1724 = vrot.slane %v1662, %v1723
    %v1725 = vlaneseq
    %v1726 = vshrl.u32 %v1725, 7
    %v1727 = vsub.s32 7, %v1726
    %v1728 = vrot.slane %v1662, %v1727
    %v1873 = vunpack.c.l.b16 %v1533
    %v1874 = vunpack.c.h.b16 %v1533
    %v1875 = vunpack.c.l.b16 %v1534
    %v1876 = vunpack.c.h.b16 %v1534
    %v1877 = vunpack.c.l.b16 %v1535
    %v1878 = vunpack.c.h.b16 %v1535
    %v1879 = vunpack.c.l.b16 %v1536
    %v1880 = vunpack.c.h.b16 %v1536
    %v1881 = vunpack.c.l.b16 %v1537
    %v1882 = vunpack.c.h.b16 %v1537
    %v1883 = vunpack.c.l.b16 %v1538
    %v1884 = vunpack.c.h.b16 %v1538
    %v1885 = vunpack.c.l.b16 %v1539
    %v1886 = vunpack.c.h.b16 %v1539
    %v1887 = vunpack.c.l.b16 %v1540
    %v1888 = vunpack.c.h.b16 %v1540
    %v1889 = vunpack.c.l.b16 %v1541
    %v1890 = vunpack.c.h.b16 %v1541
    %v1891 = vunpack.c.l.b16 %v1542
    %v1892 = vunpack.c.h.b16 %v1542
    %v1893 = vunpack.c.l.b16 %v1543
    %v1894 = vunpack.c.h.b16 %v1543
    %v1895 = vunpack.c.l.b16 %v1544
    %v1896 = vunpack.c.h.b16 %v1544
    %v1897 = vunpack.c.l.b16 %v1545
    %v1898 = vunpack.c.h.b16 %v1545
    %v1899 = vunpack.c.l.b16 %v1546
    %v1900 = vunpack.c.h.b16 %v1546
    %v1901 = vunpack.c.l.b16 %v1547
    %v1902 = vunpack.c.h.b16 %v1547
    %v1903 = vunpack.c.l.b16 %v1548
    %v1904 = vunpack.c.h.b16 %v1548
    %v1905 = vunpack.c.l.b16 %v1549
    %v1906 = vunpack.c.h.b16 %v1549
    %v1907 = vunpack.c.l.b16 %v1550
    %v1908 = vunpack.c.h.b16 %v1550
    %v1909 = vunpack.c.l.b16 %v1551
    %v1910 = vunpack.c.h.b16 %v1551
    %v1911 = vunpack.c.l.b16 %v1552
    %v1912 = vunpack.c.h.b16 %v1552
    %v1913 = vunpack.c.l.b16 %v1553
    %v1914 = vunpack.c.h.b16 %v1553
    %v1915 = vunpack.c.l.b16 %v1554
    %v1916 = vunpack.c.h.b16 %v1554
    %v1917 = vunpack.c.l.b16 %v1555
    %v1918 = vunpack.c.h.b16 %v1555
    %v1919 = vunpack.c.l.b16 %v1556
    %v1920 = vunpack.c.h.b16 %v1556
    %v1921 = vunpack.c.l.b16 %v1557
    %v1922 = vunpack.c.h.b16 %v1557
    %v1923 = vunpack.c.l.b16 %v1558
    %v1924 = vunpack.c.h.b16 %v1558
    %v1925 = vunpack.c.l.b16 %v1559
    %v1926 = vunpack.c.h.b16 %v1559
    %v1927 = vunpack.c.l.b16 %v1560
    %v1928 = vunpack.c.h.b16 %v1560
    %v1929 = vunpack.c.l.b16 %v1561
    %v1930 = vunpack.c.h.b16 %v1561
    %v1931 = vunpack.c.l.b16 %v1562
    %v1932 = vunpack.c.h.b16 %v1562
    %v1933 = vunpack.c.l.b16 %v1563
    %v1934 = vunpack.c.h.b16 %v1563
    %v1935 = vunpack.c.l.b16 %v1564
    %v1936 = vunpack.c.h.b16 %v1564
    %v1937 = vunpack.c.l.b16 %v1565
    %v1938 = vunpack.c.h.b16 %v1565
    %v1939 = vunpack.c.l.b16 %v1566
    %v1940 = vunpack.c.h.b16 %v1566
    %v1941 = vunpack.c.l.b16 %v1567
    %v1942 = vunpack.c.h.b16 %v1567
    %v1943 = vunpack.c.l.b16 %v1568
    %v1944 = vunpack.c.h.b16 %v1568
    %v1945 = vunpack.c.l.b16 %v1569
    %v1946 = vunpack.c.h.b16 %v1569
    %v1947 = vunpack.c.l.b16 %v1570
    %v1948 = vunpack.c.h.b16 %v1570
    %v1949 = vunpack.c.l.b16 %v1571
    %v1950 = vunpack.c.h.b16 %v1571
    %v1951 = vunpack.c.l.b16 %v1572
    %v1952 = vunpack.c.h.b16 %v1572
    %v1953 = vunpack.c.l.b16 %v1573
    %v1954 = vunpack.c.h.b16 %v1573
    %v1955 = vunpack.c.l.b16 %v1574
    %v1956 = vunpack.c.h.b16 %v1574
    %v1957 = vunpack.c.l.b16 %v1575
    %v1958 = vunpack.c.h.b16 %v1575
    %v1959 = vunpack.c.l.b16 %v1576
    %v1960 = vunpack.c.h.b16 %v1576
    %v1961 = vunpack.c.l.b16 %v1577
    %v1962 = vunpack.c.h.b16 %v1577
    %v1963 = vunpack.c.l.b16 %v1578
    %v1964 = vunpack.c.h.b16 %v1578
    %v1965 = vunpack.c.l.b16 %v1579
    %v1966 = vunpack.c.h.b16 %v1579
    %v1967 = vunpack.c.l.b16 %v1580
    %v1968 = vunpack.c.h.b16 %v1580
    %v1969 = vunpack.c.l.b16 %v1581
    %v1970 = vunpack.c.h.b16 %v1581
    %v1971 = vunpack.c.l.b16 %v1582
    %v1972 = vunpack.c.h.b16 %v1582
    %v1973 = vunpack.c.l.b16 %v1583
    %v1974 = vunpack.c.h.b16 %v1583
    %v1975 = vunpack.c.l.b16 %v1584
    %v1976 = vunpack.c.h.b16 %v1584
    %v1977 = vunpack.c.l.b16 %v1585
    %v1978 = vunpack.c.h.b16 %v1585
    %v1979 = vunpack.c.l.b16 %v1586
    %v1980 = vunpack.c.h.b16 %v1586
    %v1981 = vunpack.c.l.b16 %v1587
    %v1982 = vunpack.c.h.b16 %v1587
    %v1983 = vunpack.c.l.b16 %v1588
    %v1984 = vunpack.c.h.b16 %v1588
    %v1985 = vunpack.c.l.b16 %v1589
    %v1986 = vunpack.c.h.b16 %v1589
    %v1987 = vunpack.c.l.b16 %v1590
    %v1988 = vunpack.c.h.b16 %v1590
    %v1989 = vunpack.c.l.b16 %v1591
    %v1990 = vunpack.c.h.b16 %v1591
    %v1991 = vunpack.c.l.b16 %v1592
    %v1992 = vunpack.c.h.b16 %v1592
    %v1993 = vunpack.c.l.b16 %v1593
    %v1994 = vunpack.c.h.b16 %v1593
    %v1995 = vunpack.c.l.b16 %v1594
    %v1996 = vunpack.c.h.b16 %v1594
    %v1997 = vunpack.c.l.b16 %v1595
    %v1998 = vunpack.c.h.b16 %v1595
    %v1999 = vunpack.c.l.b16 %v1596
    %v2000 = vunpack.c.h.b16 %v1596
    %v2001 = vunpack.c.l.b16 %v1597
    %v2002 = vunpack.c.h.b16 %v1597
    %v2003 = vunpack.c.l.b16 %v1598
    %v2004 = vunpack.c.h.b16 %v1598
    %v2005 = vunpack.c.l.b16 %v1599
    %v2006 = vunpack.c.h.b16 %v1599
    %v2007 = vunpack.c.l.b16 %v1600
    %v2008 = vunpack.c.h.b16 %v1600
    %v2009 = vunpack.c.l.b16 %v1601
    %v2010 = vunpack.c.h.b16 %v1601
    %v2011 = vunpack.c.l.b16 %v1602
    %v2012 = vunpack.c.h.b16 %v1602
    %v2013 = vunpack.c.l.b16 %v1603
    %v2014 = vunpack.c.h.b16 %v1603
    %v2015 = vunpack.c.l.b16 %v1604
    %v2016 = vunpack.c.h.b16 %v1604
    %v2017 = vunpack.c.l.b16 %v1605
    %v2018 = vunpack.c.h.b16 %v1605
    %v2019 = vunpack.c.l.b16 %v1606
    %v2020 = vunpack.c.h.b16 %v1606
    %v2021 = vunpack.c.l.b16 %v1607
    %v2022 = vunpack.c.h.b16 %v1607
    %v2023 = vunpack.c.l.b16 %v1608
    %v2024 = vunpack.c.h.b16 %v1608
    %v2025 = vunpack.c.l.b16 %v1609
    %v2026 = vunpack.c.h.b16 %v1609
    %v2027 = vunpack.c.l.b16 %v1610
    %v2028 = vunpack.c.h.b16 %v1610
    %v2029 = vunpack.c.l.b16 %v1611
    %v2030 = vunpack.c.h.b16 %v1611
    %v2031 = vunpack.c.l.b16 %v1612
    %v2032 = vunpack.c.h.b16 %v1612
    %v2033 = vunpack.c.l.b16 %v1613
    %v2034 = vunpack.c.h.b16 %v1613
    %v2035 = vunpack.c.l.b16 %v1614
    %v2036 = vunpack.c.h.b16 %v1614
    %v2037 = vunpack.c.l.b16 %v1615
    %v2038 = vunpack.c.h.b16 %v1615
    %v2039 = vunpack.c.l.b16 %v1616
    %v2040 = vunpack.c.h.b16 %v1616
    %v2041 = vunpack.c.l.b16 %v1617
    %v2042 = vunpack.c.h.b16 %v1617
    %v2043 = vunpack.c.l.b16 %v1618
    %v2044 = vunpack.c.h.b16 %v1618
    %v2045 = vunpack.c.l.b16 %v1619
    %v2046 = vunpack.c.h.b16 %v1619
    %v2047 = vunpack.c.l.b16 %v1620
    %v2048 = vunpack.c.h.b16 %v1620
    %v2049 = vunpack.c.l.b16 %v1621
    %v2050 = vunpack.c.h.b16 %v1621
    %v2051 = vunpack.c.l.b16 %v1622
    %v2052 = vunpack.c.h.b16 %v1622
    %v2053 = vunpack.c.l.b16 %v1623
    %v2054 = vunpack.c.h.b16 %v1623
    %v2055 = vunpack.c.l.b16 %v1624
    %v2056 = vunpack.c.h.b16 %v1624
    %v2057 = vunpack.c.l.b16 %v1625
    %v2058 = vunpack.c.h.b16 %v1625
    %v2059 = vunpack.c.l.b16 %v1626
    %v2060 = vunpack.c.h.b16 %v1626
    %v2061 = vunpack.c.l.b16 %v1627
    %v2062 = vunpack.c.h.b16 %v1627
    %v2063 = vunpack.c.l.b16 %v1628
    %v2064 = vunpack.c.h.b16 %v1628
    %v2065 = vunpack.c.l.b16 %v1629
    %v2066 = vunpack.c.h.b16 %v1629
    %v2067 = vunpack.c.l.b16 %v1630
    %v2068 = vunpack.c.h.b16 %v1630
    %v2069 = vunpack.c.l.b16 %v1631
    %v2070 = vunpack.c.h.b16 %v1631
    %v2071 = vunpack.c.l.b16 %v1632
    %v2072 = vunpack.c.h.b16 %v1632
    %v2073 = vunpack.c.l.b16 %v1633
    %v2074 = vunpack.c.h.b16 %v1633
    %v2075 = vunpack.c.l.b16 %v1634
    %v2076 = vunpack.c.h.b16 %v1634
    %v2077 = vunpack.c.l.b16 %v1635
    %v2078 = vunpack.c.h.b16 %v1635
    %v2079 = vunpack.c.l.b16 %v1636
    %v2080 = vunpack.c.h.b16 %v1636
    %v2081 = vunpack.c.l.b16 %v1637
    %v2082 = vunpack.c.h.b16 %v1637
    %v2083 = vunpack.c.l.b16 %v1638
    %v2084 = vunpack.c.h.b16 %v1638
    %v2085 = vunpack.c.l.b16 %v1639
    %v2086 = vunpack.c.h.b16 %v1639
    %v2087 = vunpack.c.l.b16 %v1640
    %v2088 = vunpack.c.h.b16 %v1640
    %v2089 = vunpack.c.l.b16 %v1641
    %v2090 = vunpack.c.h.b16 %v1641
    %v2091 = vunpack.c.l.b16 %v1642
    %v2092 = vunpack.c.h.b16 %v1642
    %v2093 = vunpack.c.l.b16 %v1643
    %v2094 = vunpack.c.h.b16 %v1643
    %v2095 = vunpack.c.l.b16 %v1644
    %v2096 = vunpack.c.h.b16 %v1644
    %v2097 = vunpack.c.l.b16 %v1645
    %v2098 = vunpack.c.h.b16 %v1645
    %v2099 = vunpack.c.l.b16 %v1646
    %v2100 = vunpack.c.h.b16 %v1646
    %v2101 = vunpack.c.l.b16 %v1647
    %v2102 = vunpack.c.h.b16 %v1647
    %v2103 = vunpack.c.l.b16 %v1648
    %v2104 = vunpack.c.h.b16 %v1648
    %v2105 = vunpack.c.l.b16 %v1649
    %v2106 = vunpack.c.h.b16 %v1649
    %v2107 = vunpack.c.l.b16 %v1650
    %v2108 = vunpack.c.h.b16 %v1650
    %v2109 = vunpack.c.l.b16 %v1651
    %v2110 = vunpack.c.h.b16 %v1651
    %v2111 = vunpack.c.l.b16 %v1652
    %v2112 = vunpack.c.h.b16 %v1652
    %v2113 = vunpack.c.l.b16 %v1653
    %v2114 = vunpack.c.h.b16 %v1653
    %v2115 = vunpack.c.l.b16 %v1654
    %v2116 = vunpack.c.h.b16 %v1654
    %v2117 = vunpack.c.l.b16 %v1655
    %v2118 = vunpack.c.h.b16 %v1655
    %v2119 = vunpack.c.l.b16 %v1656
    %v2120 = vunpack.c.h.b16 %v1656
    %v2121 = vunpack.c.l.b16 %v1657
    %v2122 = vunpack.c.h.b16 %v1657
    %v2123 = vunpack.c.l.b16 %v1658
    %v2124 = vunpack.c.h.b16 %v1658
    %v2125 = vunpack.c.l.b16 %v1659
    %v2126 = vunpack.c.h.b16 %v1659
    %v2127 = vunpack.c.l.b16 %v1660
    %v2128 = vunpack.c.h.b16 %v1660
    %v2129 = vpack.c.b16 %v1889, %v1873
    %v2130 = vpack.c.b16 %v1890, %v1874
    %v2131 = vpack.c.b16 %v1891, %v1875
    %v2132 = vpack.c.b16 %v1892, %v1876
    %v2133 = vpack.c.b16 %v1893, %v1877
    %v2134 = vpack.c.b16 %v1894, %v1878
    %v2135 = vpack.c.b16 %v1895, %v1879
    %v2136 = vpack.c.b16 %v1896, %v1880
    %v2137 = vpack.c.b16 %v1897, %v1881
    %v2138 = vpack.c.b16 %v1898, %v1882
    %v2139 = vpack.c.b16 %v1899, %v1883
    %v2140 = vpack.c.b16 %v1900, %v1884
    %v2141 = vpack.c.b16 %v1901, %v1885
    %v2142 = vpack.c.b16 %v1902, %v1886
    %v2143 = vpack.c.b16 %v1903, %v1887
    %v2144 = vpack.c.b16 %v1904, %v1888
    %v2145 = vpack.c.b16 %v1921, %v1905
    %v2146 = vpack.c.b16 %v1922, %v1906
    %v2147 = vpack.c.b16 %v1923, %v1907
    %v2148 = vpack.c.b16 %v1924, %v1908
    %v2149 = vpack.c.b16 %v1925, %v1909
    %v2150 = vpack.c.b16 %v1926, %v1910
    %v2151 = vpack.c.b16 %v1927, %v1911
    %v2152 = vpack.c.b16 %v1928, %v1912
    %v2153 = vpack.c.b16 %v1929, %v1913
    %v2154 = vpack.c.b16 %v1930, %v1914
    %v2155 = vpack.c.b16 %v1931, %v1915
    %v2156 = vpack.c.b16 %v1932, %v1916
    %v2157 = vpack.c.b16 %v1933, %v1917
    %v2158 = vpack.c.b16 %v1934, %v1918
    %v2159 = vpack.c.b16 %v1935, %v1919
    %v2160 = vpack.c.b16 %v1936, %v1920
    %v2161 = vpack.c.b16 %v1953, %v1937
    %v2162 = vpack.c.b16 %v1954, %v1938
    %v2163 = vpack.c.b16 %v1955, %v1939
    %v2164 = vpack.c.b16 %v1956, %v1940
    %v2165 = vpack.c.b16 %v1957, %v1941
    %v2166 = vpack.c.b16 %v1958, %v1942
    %v2167 = vpack.c.b16 %v1959, %v1943
    %v2168 = vpack.c.b16 %v1960, %v1944
    %v2169 = vpack.c.b16 %v1961, %v1945
    %v2170 = vpack.c.b16 %v1962, %v1946
    %v2171 = vpack.c.b16 %v1963, %v1947
    %v2172 = vpack.c.b16 %v1964, %v1948
    %v2173 = vpack.c.b16 %v1965, %v1949
    %v2174 = vpack.c.b16 %v1966, %v1950
    %v2175 = vpack.c.b16 %v1967, %v1951
    %v2176 = vpack.c.b16 %v1968, %v1952
    %v2177 = vpack.c.b16 %v1985, %v1969
    %v2178 = vpack.c.b16 %v1986, %v1970
    %v2179 = vpack.c.b16 %v1987, %v1971
    %v2180 = vpack.c.b16 %v1988, %v1972
    %v2181 = vpack.c.b16 %v1989, %v1973
    %v2182 = vpack.c.b16 %v1990, %v1974
    %v2183 = vpack.c.b16 %v1991, %v1975
    %v2184 = vpack.c.b16 %v1992, %v1976
    %v2185 = vpack.c.b16 %v1993, %v1977
    %v2186 = vpack.c.b16 %v1994, %v1978
    %v2187 = vpack.c.b16 %v1995, %v1979
    %v2188 = vpack.c.b16 %v1996, %v1980
    %v2189 = vpack.c.b16 %v1997, %v1981
    %v2190 = vpack.c.b16 %v1998, %v1982
    %v2191 = vpack.c.b16 %v1999, %v1983
    %v2192 = vpack.c.b16 %v2000, %v1984
    %v2193 = vpack.c.b16 %v2017, %v2001
    %v2194 = vpack.c.b16 %v2018, %v2002
    %v2195 = vpack.c.b16 %v2019, %v2003
    %v2196 = vpack.c.b16 %v2020, %v2004
    %v2197 = vpack.c.b16 %v2021, %v2005
    %v2198 = vpack.c.b16 %v2022, %v2006
    %v2199 = vpack.c.b16 %v2023, %v2007
    %v2200 = vpack.c.b16 %v2024, %v2008
    %v2201 = vpack.c.b16 %v2025, %v2009
    %v2202 = vpack.c.b16 %v2026, %v2010
    %v2203 = vpack.c.b16 %v2027, %v2011
    %v2204 = vpack.c.b16 %v2028, %v2012
    %v2205 = vpack.c.b16 %v2029, %v2013
    %v2206 = vpack.c.b16 %v2030, %v2014
    %v2207 = vpack.c.b16 %v2031, %v2015
    %v2208 = vpack.c.b16 %v2032, %v2016
    %v2209 = vpack.c.b16 %v2049, %v2033
    %v2210 = vpack.c.b16 %v2050, %v2034
    %v2211 = vpack.c.b16 %v2051, %v2035
    %v2212 = vpack.c.b16 %v2052, %v2036
    %v2213 = vpack.c.b16 %v2053, %v2037
    %v2214 = vpack.c.b16 %v2054, %v2038
    %v2215 = vpack.c.b16 %v2055, %v2039
    %v2216 = vpack.c.b16 %v2056, %v2040
    %v2217 = vpack.c.b16 %v2057, %v2041
    %v2218 = vpack.c.b16 %v2058, %v2042
    %v2219 = vpack.c.b16 %v2059, %v2043
    %v2220 = vpack.c.b16 %v2060, %v2044
    %v2221 = vpack.c.b16 %v2061, %v2045
    %v2222 = vpack.c.b16 %v2062, %v2046
    %v2223 = vpack.c.b16 %v2063, %v2047
    %v2224 = vpack.c.b16 %v2064, %v2048
    %v2225 = vpack.c.b16 %v2081, %v2065
    %v2226 = vpack.c.b16 %v2082, %v2066
    %v2227 = vpack.c.b16 %v2083, %v2067
    %v2228 = vpack.c.b16 %v2084, %v2068
    %v2229 = vpack.c.b16 %v2085, %v2069
    %v2230 = vpack.c.b16 %v2086, %v2070
    %v2231 = vpack.c.b16 %v2087, %v2071
    %v2232 = vpack.c.b16 %v2088, %v2072
    %v2233 = vpack.c.b16 %v2089, %v2073
    %v2234 = vpack.c.b16 %v2090, %v2074
    %v2235 = vpack.c.b16 %v2091, %v2075
    %v2236 = vpack.c.b16 %v2092, %v2076
    %v2237 = vpack.c.b16 %v2093, %v2077
    %v2238 = vpack.c.b16 %v2094, %v2078
    %v2239 = vpack.c.b16 %v2095, %v2079
    %v2240 = vpack.c.b16 %v2096, %v2080
    %v2241 = vpack.c.b16 %v2113, %v2097
    %v2242 = vpack.c.b16 %v2114, %v2098
    %v2243 = vpack.c.b16 %v2115, %v2099
    %v2244 = vpack.c.b16 %v2116, %v2100
    %v2245 = vpack.c.b16 %v2117, %v2101
    %v2246 = vpack.c.b16 %v2118, %v2102
    %v2247 = vpack.c.b16 %v2119, %v2103
    %v2248 = vpack.c.b16 %v2120, %v2104
    %v2249 = vpack.c.b16 %v2121, %v2105
    %v2250 = vpack.c.b16 %v2122, %v2106
    %v2251 = vpack.c.b16 %v2123, %v2107
    %v2252 = vpack.c.b16 %v2124, %v2108
    %v2253 = vpack.c.b16 %v2125, %v2109
    %v2254 = vpack.c.b16 %v2126, %v2110
    %v2255 = vpack.c.b16 %v2127, %v2111
    %v2256 = vpack.c.b16 %v2128, %v2112
    %2385 = vmatprep.subr.bf16.mxu0 %v2242
    %2386 = vmatpush1.bf16.msra.mxu0 %v2241
    %2387 = vmatprep.subr.bf16.mxu0 %v2226
    %2388 = vmatpush1.bf16.msra.mxu0 %v2225
    %2389 = vmatprep.subr.bf16.mxu0 %v2210
    %2390 = vmatpush1.bf16.msra.mxu0 %v2209
    %2391 = vmatprep.subr.bf16.mxu0 %v2194
    %2392 = vmatpush1.bf16.msra.mxu0 %v2193
    %2393 = vmatprep.subr.bf16.mxu0 %v2178
    %2394 = vmatpush1.bf16.msra.mxu0 %v2177
    %2395 = vmatprep.subr.bf16.mxu0 %v2162
    %2396 = vmatpush1.bf16.msra.mxu0 %v2161
    %2397 = vmatprep.subr.bf16.mxu0 %v2146
    %2398 = vmatpush1.bf16.msra.mxu0 %v2145
    %2399 = vmatprep.subr.bf16.mxu0 %v2130
    %2400 = vmatpush1.bf16.msra.mxu0 %v2129
    %2401 = vmatprep.subr.bf16.mxu0 0
    %2402 = vmatpush2.bf16.msra.mxu0 0
    %2403 = vmatprep.subr.bf16.mxu0 0
    %2404 = vmatpush2.bf16.msra.mxu0 0
    %2405 = vmatprep.subr.bf16.mxu0 0
    %2406 = vmatpush2.bf16.msra.mxu0 0
    %2407 = vmatprep.subr.bf16.mxu0 0
    %2408 = vmatpush2.bf16.msra.mxu0 0
    %2409 = vmatprep.subr.bf16.mxu0 0
    %2410 = vmatpush2.bf16.msra.mxu0 0
    %2411 = vmatprep.subr.bf16.mxu0 0
    %2412 = vmatpush2.bf16.msra.mxu0 0
    %2413 = vmatprep.subr.bf16.mxu0 0
    %2414 = vmatpush2.bf16.msra.mxu0 0
    %2415 = vmatprep.subr.bf16.mxu0 0
    %2416 = vmatpush2.bf16.msra.mxu0 0
    %2417 = vmatprep.mubr.bf16.mxu0 0
    %2418 = vmatmul.mubr.bf16.gmra.mxu0 %v1532
    %v2419 = vpop.f32.mrf.mxu0
    %v2420 = vadd.f32 %v1668, %v2419
    %v2421 = vpop.f32.mrf.mxu0
    %v2422 = vadd.f32 %v1672, %v2421
    %v2423 = vpop.f32.mrf.mxu0
    %v2424 = vpop.f32.mrf.mxu0
    %2425 = vdwg.mxu0
    %2426 = vmatprep.subr.bf16.mxu0 %v2244
    %2427 = vmatpush1.bf16.msra.mxu0 %v2243
    %2428 = vmatprep.subr.bf16.mxu0 %v2228
    %2429 = vmatpush1.bf16.msra.mxu0 %v2227
    %2430 = vmatprep.subr.bf16.mxu0 %v2212
    %2431 = vmatpush1.bf16.msra.mxu0 %v2211
    %2432 = vmatprep.subr.bf16.mxu0 %v2196
    %2433 = vmatpush1.bf16.msra.mxu0 %v2195
    %2434 = vmatprep.subr.bf16.mxu0 %v2180
    %2435 = vmatpush1.bf16.msra.mxu0 %v2179
    %2436 = vmatprep.subr.bf16.mxu0 %v2164
    %2437 = vmatpush1.bf16.msra.mxu0 %v2163
    %2438 = vmatprep.subr.bf16.mxu0 %v2148
    %2439 = vmatpush1.bf16.msra.mxu0 %v2147
    %2440 = vmatprep.subr.bf16.mxu0 %v2132
    %2441 = vmatpush1.bf16.msra.mxu0 %v2131
    %2442 = vmatprep.subr.bf16.mxu0 0
    %2443 = vmatpush2.bf16.msra.mxu0 0
    %2444 = vmatprep.subr.bf16.mxu0 0
    %2445 = vmatpush2.bf16.msra.mxu0 0
    %2446 = vmatprep.subr.bf16.mxu0 0
    %2447 = vmatpush2.bf16.msra.mxu0 0
    %2448 = vmatprep.subr.bf16.mxu0 0
    %2449 = vmatpush2.bf16.msra.mxu0 0
    %2450 = vmatprep.subr.bf16.mxu0 0
    %2451 = vmatpush2.bf16.msra.mxu0 0
    %2452 = vmatprep.subr.bf16.mxu0 0
    %2453 = vmatpush2.bf16.msra.mxu0 0
    %2454 = vmatprep.subr.bf16.mxu0 0
    %2455 = vmatpush2.bf16.msra.mxu0 0
    %2456 = vmatprep.subr.bf16.mxu0 0
    %2457 = vmatpush2.bf16.msra.mxu0 0
    %2458 = vmatprep.mubr.bf16.mxu0 0
    %2459 = vmatmul.mubr.bf16.gmra.mxu0 %v1532
    %v2460 = vpop.f32.mrf.mxu0
    %v2461 = vadd.f32 %v1676, %v2460
    %v2462 = vpop.f32.mrf.mxu0
    %v2463 = vadd.f32 %v1680, %v2462
    %v2464 = vpop.f32.mrf.mxu0
    %v2465 = vpop.f32.mrf.mxu0
    %2466 = vdwg.mxu0
    %2467 = vmatprep.subr.bf16.mxu0 %v2246
    %2468 = vmatpush1.bf16.msra.mxu0 %v2245
    %2469 = vmatprep.subr.bf16.mxu0 %v2230
    %2470 = vmatpush1.bf16.msra.mxu0 %v2229
    %2471 = vmatprep.subr.bf16.mxu0 %v2214
    %2472 = vmatpush1.bf16.msra.mxu0 %v2213
    %2473 = vmatprep.subr.bf16.mxu0 %v2198
    %2474 = vmatpush1.bf16.msra.mxu0 %v2197
    %2475 = vmatprep.subr.bf16.mxu0 %v2182
    %2476 = vmatpush1.bf16.msra.mxu0 %v2181
    %2477 = vmatprep.subr.bf16.mxu0 %v2166
    %2478 = vmatpush1.bf16.msra.mxu0 %v2165
    %2479 = vmatprep.subr.bf16.mxu0 %v2150
    %2480 = vmatpush1.bf16.msra.mxu0 %v2149
    %2481 = vmatprep.subr.bf16.mxu0 %v2134
    %2482 = vmatpush1.bf16.msra.mxu0 %v2133
    %2483 = vmatprep.subr.bf16.mxu0 0
    %2484 = vmatpush2.bf16.msra.mxu0 0
    %2485 = vmatprep.subr.bf16.mxu0 0
    %2486 = vmatpush2.bf16.msra.mxu0 0
    %2487 = vmatprep.subr.bf16.mxu0 0
    %2488 = vmatpush2.bf16.msra.mxu0 0
    %2489 = vmatprep.subr.bf16.mxu0 0
    %2490 = vmatpush2.bf16.msra.mxu0 0
    %2491 = vmatprep.subr.bf16.mxu0 0
    %2492 = vmatpush2.bf16.msra.mxu0 0
    %2493 = vmatprep.subr.bf16.mxu0 0
    %2494 = vmatpush2.bf16.msra.mxu0 0
    %2495 = vmatprep.subr.bf16.mxu0 0
    %2496 = vmatpush2.bf16.msra.mxu0 0
    %2497 = vmatprep.subr.bf16.mxu0 0
    %2498 = vmatpush2.bf16.msra.mxu0 0
    %2499 = vmatprep.mubr.bf16.mxu0 0
    %2500 = vmatmul.mubr.bf16.gmra.mxu0 %v1532
    %v2501 = vpop.f32.mrf.mxu0
    %v2502 = vadd.f32 %v1684, %v2501
    %v2503 = vpop.f32.mrf.mxu0
    %v2504 = vadd.f32 %v1688, %v2503
    %v2505 = vpop.f32.mrf.mxu0
    %v2506 = vpop.f32.mrf.mxu0
    %2507 = vdwg.mxu0
    %2508 = vmatprep.subr.bf16.mxu0 %v2248
    %2509 = vmatpush1.bf16.msra.mxu0 %v2247
    %2510 = vmatprep.subr.bf16.mxu0 %v2232
    %2511 = vmatpush1.bf16.msra.mxu0 %v2231
    %2512 = vmatprep.subr.bf16.mxu0 %v2216
    %2513 = vmatpush1.bf16.msra.mxu0 %v2215
    %2514 = vmatprep.subr.bf16.mxu0 %v2200
    %2515 = vmatpush1.bf16.msra.mxu0 %v2199
    %2516 = vmatprep.subr.bf16.mxu0 %v2184
    %2517 = vmatpush1.bf16.msra.mxu0 %v2183
    %2518 = vmatprep.subr.bf16.mxu0 %v2168
    %2519 = vmatpush1.bf16.msra.mxu0 %v2167
    %2520 = vmatprep.subr.bf16.mxu0 %v2152
    %2521 = vmatpush1.bf16.msra.mxu0 %v2151
    %2522 = vmatprep.subr.bf16.mxu0 %v2136
    %2523 = vmatpush1.bf16.msra.mxu0 %v2135
    %2524 = vmatprep.subr.bf16.mxu0 0
    %2525 = vmatpush2.bf16.msra.mxu0 0
    %2526 = vmatprep.subr.bf16.mxu0 0
    %2527 = vmatpush2.bf16.msra.mxu0 0
    %2528 = vmatprep.subr.bf16.mxu0 0
    %2529 = vmatpush2.bf16.msra.mxu0 0
    %2530 = vmatprep.subr.bf16.mxu0 0
    %2531 = vmatpush2.bf16.msra.mxu0 0
    %2532 = vmatprep.subr.bf16.mxu0 0
    %2533 = vmatpush2.bf16.msra.mxu0 0
    %2534 = vmatprep.subr.bf16.mxu0 0
    %2535 = vmatpush2.bf16.msra.mxu0 0
    %2536 = vmatprep.subr.bf16.mxu0 0
    %2537 = vmatpush2.bf16.msra.mxu0 0
    %2538 = vmatprep.subr.bf16.mxu0 0
    %2539 = vmatpush2.bf16.msra.mxu0 0
    %2540 = vmatprep.mubr.bf16.mxu0 0
    %2541 = vmatmul.mubr.bf16.gmra.mxu0 %v1532
    %v2542 = vpop.f32.mrf.mxu0
    %v2543 = vadd.f32 %v1692, %v2542
    %v2544 = vpop.f32.mrf.mxu0
    %v2545 = vadd.f32 %v1696, %v2544
    %v2546 = vpop.f32.mrf.mxu0
    %v2547 = vpop.f32.mrf.mxu0
    %2548 = vdwg.mxu0
    %2549 = vmatprep.subr.bf16.mxu0 %v2250
    %2550 = vmatpush1.bf16.msra.mxu0 %v2249
    %2551 = vmatprep.subr.bf16.mxu0 %v2234
    %2552 = vmatpush1.bf16.msra.mxu0 %v2233
    %2553 = vmatprep.subr.bf16.mxu0 %v2218
    %2554 = vmatpush1.bf16.msra.mxu0 %v2217
    %2555 = vmatprep.subr.bf16.mxu0 %v2202
    %2556 = vmatpush1.bf16.msra.mxu0 %v2201
    %2557 = vmatprep.subr.bf16.mxu0 %v2186
    %2558 = vmatpush1.bf16.msra.mxu0 %v2185
    %2559 = vmatprep.subr.bf16.mxu0 %v2170
    %2560 = vmatpush1.bf16.msra.mxu0 %v2169
    %2561 = vmatprep.subr.bf16.mxu0 %v2154
    %2562 = vmatpush1.bf16.msra.mxu0 %v2153
    %2563 = vmatprep.subr.bf16.mxu0 %v2138
    %2564 = vmatpush1.bf16.msra.mxu0 %v2137
    %2565 = vmatprep.subr.bf16.mxu0 0
    %2566 = vmatpush2.bf16.msra.mxu0 0
    %2567 = vmatprep.subr.bf16.mxu0 0
    %2568 = vmatpush2.bf16.msra.mxu0 0
    %2569 = vmatprep.subr.bf16.mxu0 0
    %2570 = vmatpush2.bf16.msra.mxu0 0
    %2571 = vmatprep.subr.bf16.mxu0 0
    %2572 = vmatpush2.bf16.msra.mxu0 0
    %2573 = vmatprep.subr.bf16.mxu0 0
    %2574 = vmatpush2.bf16.msra.mxu0 0
    %2575 = vmatprep.subr.bf16.mxu0 0
    %2576 = vmatpush2.bf16.msra.mxu0 0
    %2577 = vmatprep.subr.bf16.mxu0 0
    %2578 = vmatpush2.bf16.msra.mxu0 0
    %2579 = vmatprep.subr.bf16.mxu0 0
    %2580 = vmatpush2.bf16.msra.mxu0 0
    %2581 = vmatprep.mubr.bf16.mxu0 0
    %2582 = vmatmul.mubr.bf16.gmra.mxu0 %v1532
    %v2583 = vpop.f32.mrf.mxu0
    %v2584 = vadd.f32 %v1700, %v2583
    %v2585 = vpop.f32.mrf.mxu0
    %v2586 = vadd.f32 %v1704, %v2585
    %v2587 = vpop.f32.mrf.mxu0
    %v2588 = vpop.f32.mrf.mxu0
    %2589 = vdwg.mxu0
    %2590 = vmatprep.subr.bf16.mxu0 %v2252
    %2591 = vmatpush1.bf16.msra.mxu0 %v2251
    %2592 = vmatprep.subr.bf16.mxu0 %v2236
    %2593 = vmatpush1.bf16.msra.mxu0 %v2235
    %2594 = vmatprep.subr.bf16.mxu0 %v2220
    %2595 = vmatpush1.bf16.msra.mxu0 %v2219
    %2596 = vmatprep.subr.bf16.mxu0 %v2204
    %2597 = vmatpush1.bf16.msra.mxu0 %v2203
    %2598 = vmatprep.subr.bf16.mxu0 %v2188
    %2599 = vmatpush1.bf16.msra.mxu0 %v2187
    %2600 = vmatprep.subr.bf16.mxu0 %v2172
    %2601 = vmatpush1.bf16.msra.mxu0 %v2171
    %2602 = vmatprep.subr.bf16.mxu0 %v2156
    %2603 = vmatpush1.bf16.msra.mxu0 %v2155
    %2604 = vmatprep.subr.bf16.mxu0 %v2140
    %2605 = vmatpush1.bf16.msra.mxu0 %v2139
    %2606 = vmatprep.subr.bf16.mxu0 0
    %2607 = vmatpush2.bf16.msra.mxu0 0
    %2608 = vmatprep.subr.bf16.mxu0 0
    %2609 = vmatpush2.bf16.msra.mxu0 0
    %2610 = vmatprep.subr.bf16.mxu0 0
    %2611 = vmatpush2.bf16.msra.mxu0 0
    %2612 = vmatprep.subr.bf16.mxu0 0
    %2613 = vmatpush2.bf16.msra.mxu0 0
    %2614 = vmatprep.subr.bf16.mxu0 0
    %2615 = vmatpush2.bf16.msra.mxu0 0
    %2616 = vmatprep.subr.bf16.mxu0 0
    %2617 = vmatpush2.bf16.msra.mxu0 0
    %2618 = vmatprep.subr.bf16.mxu0 0
    %2619 = vmatpush2.bf16.msra.mxu0 0
    %2620 = vmatprep.subr.bf16.mxu0 0
    %2621 = vmatpush2.bf16.msra.mxu0 0
    %2622 = vmatprep.mubr.bf16.mxu0 0
    %2623 = vmatmul.mubr.bf16.gmra.mxu0 %v1532
    %v2624 = vpop.f32.mrf.mxu0
    %v2625 = vadd.f32 %v1708, %v2624
    %v2626 = vpop.f32.mrf.mxu0
    %v2627 = vadd.f32 %v1712, %v2626
    %v2628 = vpop.f32.mrf.mxu0
    %v2629 = vpop.f32.mrf.mxu0
    %2630 = vdwg.mxu0
    %2631 = vmatprep.subr.bf16.mxu0 %v2254
    %2632 = vmatpush1.bf16.msra.mxu0 %v2253
    %2633 = vmatprep.subr.bf16.mxu0 %v2238
    %2634 = vmatpush1.bf16.msra.mxu0 %v2237
    %2635 = vmatprep.subr.bf16.mxu0 %v2222
    %2636 = vmatpush1.bf16.msra.mxu0 %v2221
    %2637 = vmatprep.subr.bf16.mxu0 %v2206
    %2638 = vmatpush1.bf16.msra.mxu0 %v2205
    %2639 = vmatprep.subr.bf16.mxu0 %v2190
    %2640 = vmatpush1.bf16.msra.mxu0 %v2189
    %2641 = vmatprep.subr.bf16.mxu0 %v2174
    %2642 = vmatpush1.bf16.msra.mxu0 %v2173
    %2643 = vmatprep.subr.bf16.mxu0 %v2158
    %2644 = vmatpush1.bf16.msra.mxu0 %v2157
    %2645 = vmatprep.subr.bf16.mxu0 %v2142
    %2646 = vmatpush1.bf16.msra.mxu0 %v2141
    %2647 = vmatprep.subr.bf16.mxu0 0
    %2648 = vmatpush2.bf16.msra.mxu0 0
    %2649 = vmatprep.subr.bf16.mxu0 0
    %2650 = vmatpush2.bf16.msra.mxu0 0
    %2651 = vmatprep.subr.bf16.mxu0 0
    %2652 = vmatpush2.bf16.msra.mxu0 0
    %2653 = vmatprep.subr.bf16.mxu0 0
    %2654 = vmatpush2.bf16.msra.mxu0 0
    %2655 = vmatprep.subr.bf16.mxu0 0
    %2656 = vmatpush2.bf16.msra.mxu0 0
    %2657 = vmatprep.subr.bf16.mxu0 0
    %2658 = vmatpush2.bf16.msra.mxu0 0
    %2659 = vmatprep.subr.bf16.mxu0 0
    %2660 = vmatpush2.bf16.msra.mxu0 0
    %2661 = vmatprep.subr.bf16.mxu0 0
    %2662 = vmatpush2.bf16.msra.mxu0 0
    %2663 = vmatprep.mubr.bf16.mxu0 0
    %2664 = vmatmul.mubr.bf16.gmra.mxu0 %v1532
    %v2665 = vpop.f32.mrf.mxu0
    %v2666 = vadd.f32 %v1716, %v2665
    %v2667 = vpop.f32.mrf.mxu0
    %v2668 = vadd.f32 %v1720, %v2667
    %v2669 = vpop.f32.mrf.mxu0
    %v2670 = vpop.f32.mrf.mxu0
    %2671 = vdwg.mxu0
    %2672 = vmatprep.subr.bf16.mxu0 %v2256
    %2673 = vmatpush1.bf16.msra.mxu0 %v2255
    %2674 = vmatprep.subr.bf16.mxu0 %v2240
    %2675 = vmatpush1.bf16.msra.mxu0 %v2239
    %2676 = vmatprep.subr.bf16.mxu0 %v2224
    %2677 = vmatpush1.bf16.msra.mxu0 %v2223
    %2678 = vmatprep.subr.bf16.mxu0 %v2208
    %2679 = vmatpush1.bf16.msra.mxu0 %v2207
    %2680 = vmatprep.subr.bf16.mxu0 %v2192
    %2681 = vmatpush1.bf16.msra.mxu0 %v2191
    %2682 = vmatprep.subr.bf16.mxu0 %v2176
    %2683 = vmatpush1.bf16.msra.mxu0 %v2175
    %2684 = vmatprep.subr.bf16.mxu0 %v2160
    %2685 = vmatpush1.bf16.msra.mxu0 %v2159
    %2686 = vmatprep.subr.bf16.mxu0 %v2144
    %2687 = vmatpush1.bf16.msra.mxu0 %v2143
    %2688 = vmatprep.subr.bf16.mxu0 0
    %2689 = vmatpush2.bf16.msra.mxu0 0
    %2690 = vmatprep.subr.bf16.mxu0 0
    %2691 = vmatpush2.bf16.msra.mxu0 0
    %2692 = vmatprep.subr.bf16.mxu0 0
    %2693 = vmatpush2.bf16.msra.mxu0 0
    %2694 = vmatprep.subr.bf16.mxu0 0
    %2695 = vmatpush2.bf16.msra.mxu0 0
    %2696 = vmatprep.subr.bf16.mxu0 0
    %2697 = vmatpush2.bf16.msra.mxu0 0
    %2698 = vmatprep.subr.bf16.mxu0 0
    %2699 = vmatpush2.bf16.msra.mxu0 0
    %2700 = vmatprep.subr.bf16.mxu0 0
    %2701 = vmatpush2.bf16.msra.mxu0 0
    %2702 = vmatprep.subr.bf16.mxu0 0
    %2703 = vmatpush2.bf16.msra.mxu0 0
    %2704 = vmatprep.mubr.bf16.mxu0 0
    %2705 = vmatmul.mubr.bf16.gmra.mxu0 %v1532
    %v2706 = vpop.f32.mrf.mxu0
    %v2707 = vadd.f32 %v1724, %v2706
    %v2708 = vpop.f32.mrf.mxu0
    %v2709 = vadd.f32 %v1728, %v2708
    %v2710 = vpop.f32.mrf.mxu0
    %v2711 = vpop.f32.mrf.mxu0
    %2712 = vdwg.mxu0
    %v2729 = vcombine.low %v2420, %v2422
    %v2730 = vcombine.low %v2461, %v2463
    %v2732 = vunpack.c.l.s4 1983009808
    %v2733 = vunpack.c.0.s8 %v2732
    %v2734 = vlaneseq
    %v2735 = vshrl.u32 %v2734, 7
    %v2736 = vsub.s32 %v2733, %v2735
    %v2737 = vrot.slane %v2729, %v2736
    %v2739 = vunpack.c.l.s4 1983009808
    %v2740 = vunpack.c.0.s8 %v2739
    %v2741 = vlaneseq
    %v2742 = vshrl.u32 %v2741, 7
    %v2743 = vsub.s32 %v2740, %v2742
    %v2744 = vrot.slane %v2730, %v2743
    %v2745 = vcombine.low %v2737, %v2744
    %v2746 = vcombine.low %v2502, %v2504
    %v2747 = vcombine.low %v2543, %v2545
    %v2749 = vunpack.c.l.s4 1983009808
    %v2750 = vunpack.c.0.s8 %v2749
    %v2751 = vlaneseq
    %v2752 = vshrl.u32 %v2751, 7
    %v2753 = vsub.s32 %v2750, %v2752
    %v2754 = vrot.slane %v2746, %v2753
    %v2756 = vunpack.c.l.s4 1983009808
    %v2757 = vunpack.c.0.s8 %v2756
    %v2758 = vlaneseq
    %v2759 = vshrl.u32 %v2758, 7
    %v2760 = vsub.s32 %v2757, %v2759
    %v2761 = vrot.slane %v2747, %v2760
    %v2762 = vcombine.low %v2754, %v2761
    %v2763 = vcombine.low %v2584, %v2586
    %v2764 = vcombine.low %v2625, %v2627
    %v2766 = vunpack.c.l.s4 1983009808
    %v2767 = vunpack.c.0.s8 %v2766
    %v2768 = vlaneseq
    %v2769 = vshrl.u32 %v2768, 7
    %v2770 = vsub.s32 %v2767, %v2769
    %v2771 = vrot.slane %v2763, %v2770
    %v2773 = vunpack.c.l.s4 1983009808
    %v2774 = vunpack.c.0.s8 %v2773
    %v2775 = vlaneseq
    %v2776 = vshrl.u32 %v2775, 7
    %v2777 = vsub.s32 %v2774, %v2776
    %v2778 = vrot.slane %v2764, %v2777
    %v2779 = vcombine.low %v2771, %v2778
    %v2780 = vcombine.low %v2666, %v2668
    %v2781 = vcombine.low %v2707, %v2709
    %v2783 = vunpack.c.l.s4 1983009808
    %v2784 = vunpack.c.0.s8 %v2783
    %v2785 = vlaneseq
    %v2786 = vshrl.u32 %v2785, 7
    %v2787 = vsub.s32 %v2784, %v2786
    %v2788 = vrot.slane %v2780, %v2787
    %v2790 = vunpack.c.l.s4 1983009808
    %v2791 = vunpack.c.0.s8 %v2790
    %v2792 = vlaneseq
    %v2793 = vshrl.u32 %v2792, 7
    %v2794 = vsub.s32 %v2791, %v2793
    %v2795 = vrot.slane %v2781, %v2794
    %v2796 = vcombine.low %v2788, %v2795
    %2801 = vst [vmem:[#allocation10] sm:$0xff] %v2745
    %2802 = vst [vmem:[#allocation10 + $0x8] sm:$0xff] %v2762
    %2803 = vst [vmem:[#allocation10 + $0x10] sm:$0xff] %v2779
    %2804 = vst [vmem:[#allocation10 + $0x18] sm:$0xff] %v2796
    // Predicated region
    $region38: #{tpu_custom_call.1} parent=1 // pred_check
      _
    $region39: #{tpu_custom_call.1} parent=1 // pred_check_branch
      %2806 = sbr.rel (0) target = $region41
    $region40: #{tpu_custom_call.1} parent=1 // pred_region
      %s2808 = ssub.s32 512, 512
      %2809 = vsyncadd [#allocation4], %s2808
      %s2811 = sshll.u32 [#allocation10], 4
      %s2812 = int_to_ptr.vmem [resolvable:$true] %s2811
      %2814 = dma.vmem_to_hbm [thread:$0]  %s2812, 512, %s5, [#allocation4]
    $region41: #{tpu_custom_call.1} parent=1 // pred_fallthru
      _
    // Predicated region
    $region42: #{tpu_custom_call.1} parent=1 // pred_check
      _
    $region43: #{tpu_custom_call.1} parent=1 // pred_check_branch
      %2816 = sbr.rel (0) target = $region45
    $region44: #{tpu_custom_call.1} parent=1 // pred_region
      %2817 = dma.done [#allocation4], 512
    $region45: #{tpu_custom_call.1} parent=1 // pred_fallthru
      _
    %2818 = vsyncpa [#allocation3], 1
    %2819 = vsyncpa [#allocation6], 1
    %2820 = vsyncpa [#allocation9], 1
    %2821 = vsyncpa [#allocation4], 1

</llo_original>
